<compile_context>
chip_gen: v6e
topology: v6e:2x2x1
jax: 0.10.0
libtpu: 0.0.40
codegen_flags: <defaults>
</compile_context>

<pallas_src>
import jax
import jax.numpy as jnp
from jax.experimental import pallas as pl
from jax.experimental.pallas import tpu as pltpu


def wd_gcn_reg_kernel(at_ref, xt_ref, wt_ref, wgate_ref, bgate_ref,
                      h0_ref, c0_ref, wlin_ref, blin_ref, out_ref):
    T, N, _ = at_ref.shape           # at_ref[t] == A[t]^T
    H = wt_ref.shape[0]

    # Hoisted parameter loads (materialized once, outside the unrolled loops).
    wt = wt_ref[...]                 # (H, F)   == W^T
    wgate = wgate_ref[...]           # (4H, 2H) == [Wf|Wj|Wo|Wc]^T | [Uf|Uj|Uo|Uc]^T
    bgate = bgate_ref[...]           # (4H, 1)  == [bf;bj;bo;bc] (lane-broadcast)
    wlin = wlin_ref[...]             # (H, 1)   lin1 weight column
    blin = blin_ref[...]             # (1, 1)   lin1 bias

    # ---- GCN part, hoisted off the recurrence ------------------------------
    # XW^T for all timesteps in one batched matmul: (H, F) @ (F, T*N).
    xw_all = jnp.dot(wt, xt_ref[...], preferred_element_type=jnp.float32)

    # Y^T_t = relu( (X_t @ W)^T @ A_t^T )  -- each exactly one (8,128) vreg.
    ys = []
    for t in range(T):
        xw_t = xw_all[:, t * N:(t + 1) * N]                              # (H, N)
        ys.append(jnp.maximum(
            jnp.dot(xw_t, at_ref[t], preferred_element_type=jnp.float32), 0.0))

    # ---- LSTM recurrence (transposed state: h, c are (H, N)) ---------------
    h = jnp.broadcast_to(h0_ref[...], (H, N))        # h_init.repeat(N, 1)^T
    c = jnp.broadcast_to(c0_ref[...], (H, N))        # c_init.repeat(N, 1)^T

    rows = []
    for t in range(T):
        yh = jnp.concatenate([ys[t], h], axis=0)                         # (2H, N)
        gpre = jnp.dot(wgate, yh,
                       preferred_element_type=jnp.float32) + bgate       # (4H, N)
        # sigmoid(x) == 0.5*tanh(0.5*x) + 0.5  (single EUP push per vreg).
        g = 0.5 * jnp.tanh(0.5 * gpre) + 0.5
        f = g[0 * H:1 * H]
        j = g[1 * H:2 * H]
        o = g[2 * H:3 * H]
        ct = g[3 * H:4 * H]   # NB: reference applies *sigmoid* (not tanh)
                              # to the candidate cell; kept as-is.
        c = j * ct + f * c
        h = o * jnp.tanh(c)

        # lin1 head (output width 1): sublane-weighted reduce -> (1, N) row.
        rows.append(jnp.sum(h * wlin, axis=0, keepdims=True) + blin)

    # Single lane-dense unmasked store of the whole (T, N) = (8, 128) tile.
    out_ref[...] = jnp.concatenate(rows, axis=0)


def wd_gcn_reg_forward(A, X, params):
    T, N, F = X.shape
    H = params["W"].shape[1]

    # ---- wrapper-side layout plumbing (done once) ---------------------------
    A_T = jnp.transpose(A, (0, 2, 1))                                  # A_T[t] = A[t]^T
    X_flat = jnp.transpose(X, (2, 0, 1)).reshape(F, T * N)             # (F, T*N)
    Wt = params["W"].T                                                  # (H, F)

    # Stack the 4 gate weights (transposed) and fuse Y- and h-operand blocks.
    Wg_stack = jnp.transpose(params["Wg"], (0, 2, 1)).reshape(4 * H, H)   # (4H, H)
    Ug_stack = jnp.transpose(params["Ug"], (0, 2, 1)).reshape(4 * H, H)   # (4H, H)
    W_gates = jnp.concatenate([Wg_stack, Ug_stack], axis=1)               # (4H, 2H)
    bg_col = params["bg"].reshape(4 * H, 1)                               # (4H, 1)

    h0 = params["h_init"].reshape(H, 1)                                   # (H, 1)
    c0 = params["c_init"].reshape(H, 1)                                   # (H, 1)
    wlin_col = params["wlin"].reshape(H, 1)                               # (H, 1)
    blin = params["blin"].reshape(1, 1)                                   # (1, 1)

    vmem = lambda: pl.BlockSpec(memory_space=pltpu.MemorySpace.VMEM)

    out = pl.pallas_call(
        wd_gcn_reg_kernel,
        out_shape=jax.ShapeDtypeStruct((T, N), jnp.float32),
        in_specs=[vmem() for _ in range(9)],   # everything VMEM-resident
        out_specs=vmem(),
    )(A_T, X_flat, Wt, W_gates, bg_col, h0, c0, wlin_col, blin)

    return out   # already (T, N) -- no trailing slice needed


def ref_forward(A, X, params):
    """Pure-JAX reference mirroring the PyTorch module exactly."""
    T, N, F = X.shape
    H = params["W"].shape[1]
    AX = jnp.einsum("tij,tjf->tif", A, X)
    Y = jnp.maximum(AX @ params["W"], 0.0)
    Wg, Ug, bg = params["Wg"], params["Ug"], params["bg"]
    h = jnp.broadcast_to(params["h_init"], (N, H))
    c = jnp.broadcast_to(params["c_init"], (N, H))
    zs = []
    for time in range(T):
        f = jax.nn.sigmoid(Y[time] @ Wg[0] + h @ Ug[0] + bg[0])
        j = jax.nn.sigmoid(Y[time] @ Wg[1] + h @ Ug[1] + bg[1])
        o = jax.nn.sigmoid(Y[time] @ Wg[2] + h @ Ug[2] + bg[2])
        ct = jax.nn.sigmoid(Y[time] @ Wg[3] + h @ Ug[3] + bg[3])
        c = j * ct + f * c
        h = o * jnp.tanh(c)
        zs.append(h)
    Z = jnp.stack(zs, axis=0)
    out = Z @ params["wlin"] + params["blin"][0, 0]
    return out[:, :, 0]


if __name__ == "__main__":
    # Small shapes consistent with the module: T time steps, N nodes,
    # F input features, H = hidden_feat[0].
    T, N, F, H = 8, 128, 16, 8

    key = jax.random.PRNGKey(0)
    keys = jax.random.split(key, 12)

    # Inputs (dense adjacency stands in for the sparse A[k] list).
    A = jax.random.normal(keys[0], (T, N, N), dtype=jnp.float32) * 0.05
    X = jax.random.normal(keys[1], (T, N, F), dtype=jnp.float32)

    # Deterministic parameter init (shapes from WD_GCN_reg.__init__).
    params = {
        "W":      jax.random.normal(keys[2], (F, H), jnp.float32),
        "Wg":     jax.random.normal(keys[3], (4, H, H), jnp.float32),   # [Wf,Wj,Wo,Wc]
        "Ug":     jax.random.normal(keys[4], (4, H, H), jnp.float32),   # [Uf,Uj,Uo,Uc]
        "bg":     jax.random.normal(keys[5], (4, H), jnp.float32),      # [bf,bj,bo,bc]
        "h_init": jax.random.normal(keys[6], (1, H), jnp.float32),
        "c_init": jax.random.normal(keys[7], (1, H), jnp.float32),
        "wlin":   jax.random.normal(keys[8], (H, 1), jnp.float32) * 0.1,  # lin1.weight^T
        "blin":   jax.random.normal(keys[9], (1, 1), jnp.float32) * 0.1,  # lin1.bias
    }

    out = wd_gcn_reg_forward(A, X, params)
    out = jax.block_until_ready(out)

    ref = ref_forward(A, X, params)
    assert out.shape == (T, N), out.shape
    assert jnp.allclose(out, ref, rtol=1e-4, atol=1e-4), (
        float(jnp.max(jnp.abs(out - ref))))

    print("KERNEL_OK")
</pallas_src>

<mosaic_0001>
module attributes {stable_mosaic.version = 11 : i64} {
  func.func @wd_gcn_reg_kernel(%arg0: memref<8x128x128xf32, #tpu.memory_space<vmem>>, %arg1: memref<16x1024xf32, #tpu.memory_space<vmem>>, %arg2: memref<8x16xf32, #tpu.memory_space<vmem>>, %arg3: memref<32x16xf32, #tpu.memory_space<vmem>>, %arg4: memref<32x1xf32, #tpu.memory_space<vmem>>, %arg5: memref<8x1xf32, #tpu.memory_space<vmem>>, %arg6: memref<8x1xf32, #tpu.memory_space<vmem>>, %arg7: memref<8x1xf32, #tpu.memory_space<vmem>>, %arg8: memref<1x1xf32, #tpu.memory_space<vmem>>, %arg9: memref<8x128xf32, #tpu.memory_space<vmem>>) attributes {dimension_semantics = [], scalar_prefetch = 0 : i64, scratch_operands = 0 : i64, tpu.core_type = #tpu.core_type<tc>} {
    %c0 = arith.constant 0 : index
    %c0_0 = arith.constant 0 : index
    %0 = vector.load %arg2[%c0, %c0_0] : memref<8x16xf32, #tpu.memory_space<vmem>>, vector<8x16xf32>
    %c0_1 = arith.constant 0 : index
    %c0_2 = arith.constant 0 : index
    %1 = vector.load %arg3[%c0_1, %c0_2] : memref<32x16xf32, #tpu.memory_space<vmem>>, vector<32x16xf32>
    %c0_3 = arith.constant 0 : index
    %c0_4 = arith.constant 0 : index
    %2 = vector.load %arg4[%c0_3, %c0_4] : memref<32x1xf32, #tpu.memory_space<vmem>>, vector<32x1xf32>
    %c0_5 = arith.constant 0 : index
    %c0_6 = arith.constant 0 : index
    %3 = vector.load %arg7[%c0_5, %c0_6] : memref<8x1xf32, #tpu.memory_space<vmem>>, vector<8x1xf32>
    %c0_7 = arith.constant 0 : index
    %c0_8 = arith.constant 0 : index
    %4 = vector.load %arg8[%c0_7, %c0_8] : memref<1x1xf32, #tpu.memory_space<vmem>>, vector<1x1xf32>
    %c0_9 = arith.constant 0 : index
    %c0_10 = arith.constant 0 : index
    %5 = vector.load %arg1[%c0_9, %c0_10] : memref<16x1024xf32, #tpu.memory_space<vmem>>, vector<16x1024xf32>
    %cst = arith.constant dense<0.000000e+00> : vector<8x1024xf32>
    %6 = tpu.matmul %0, %5, %cst {dimension_numbers = #tpu.dot_dimension_numbers<[1], [0], [0], [1], [0, 0, 1, 1], [], []>} : vector<8x16xf32>, vector<16x1024xf32>, vector<8x1024xf32> -> vector<8x1024xf32>
    %7 = vector.extract_strided_slice %6 {offsets = [0, 0], sizes = [8, 128], strides = [1, 1]} : vector<8x1024xf32> to vector<8x128xf32>
    %c0_11 = arith.constant 0 : index
    %c0_12 = arith.constant 0 : index
    %c0_13 = arith.constant 0 : index
    %8 = vector.load %arg0[%c0_11, %c0_12, %c0_13] : memref<8x128x128xf32, #tpu.memory_space<vmem>>, vector<1x128x128xf32>
    %9 = vector.shape_cast %8 : vector<1x128x128xf32> to vector<128x128xf32>
    %cst_14 = arith.constant dense<0.000000e+00> : vector<8x128xf32>
    %10 = tpu.matmul %7, %9, %cst_14 {dimension_numbers = #tpu.dot_dimension_numbers<[1], [0], [0], [1], [0, 0, 1, 1], [], []>} : vector<8x128xf32>, vector<128x128xf32>, vector<8x128xf32> -> vector<8x128xf32>
    %cst_15 = arith.constant 0.000000e+00 : f32
    %11 = vector.broadcast %cst_15 : f32 to vector<8x128xf32>
    %12 = arith.maximumf %10, %11 : vector<8x128xf32>
    %13 = vector.extract_strided_slice %6 {offsets = [0, 128], sizes = [8, 128], strides = [1, 1]} : vector<8x1024xf32> to vector<8x128xf32>
    %c1 = arith.constant 1 : index
    %c0_16 = arith.constant 0 : index
    %c0_17 = arith.constant 0 : index
    %14 = vector.load %arg0[%c1, %c0_16, %c0_17] : memref<8x128x128xf32, #tpu.memory_space<vmem>>, vector<1x128x128xf32>
    %15 = vector.shape_cast %14 : vector<1x128x128xf32> to vector<128x128xf32>
    %cst_18 = arith.constant dense<0.000000e+00> : vector<8x128xf32>
    %16 = tpu.matmul %13, %15, %cst_18 {dimension_numbers = #tpu.dot_dimension_numbers<[1], [0], [0], [1], [0, 0, 1, 1], [], []>} : vector<8x128xf32>, vector<128x128xf32>, vector<8x128xf32> -> vector<8x128xf32>
    %cst_19 = arith.constant 0.000000e+00 : f32
    %17 = vector.broadcast %cst_19 : f32 to vector<8x128xf32>
    %18 = arith.maximumf %16, %17 : vector<8x128xf32>
    %19 = vector.extract_strided_slice %6 {offsets = [0, 256], sizes = [8, 128], strides = [1, 1]} : vector<8x1024xf32> to vector<8x128xf32>
    %c2 = arith.constant 2 : index
    %c0_20 = arith.constant 0 : index
    %c0_21 = arith.constant 0 : index
    %20 = vector.load %arg0[%c2, %c0_20, %c0_21] : memref<8x128x128xf32, #tpu.memory_space<vmem>>, vector<1x128x128xf32>
    %21 = vector.shape_cast %20 : vector<1x128x128xf32> to vector<128x128xf32>
    %cst_22 = arith.constant dense<0.000000e+00> : vector<8x128xf32>
    %22 = tpu.matmul %19, %21, %cst_22 {dimension_numbers = #tpu.dot_dimension_numbers<[1], [0], [0], [1], [0, 0, 1, 1], [], []>} : vector<8x128xf32>, vector<128x128xf32>, vector<8x128xf32> -> vector<8x128xf32>
    %cst_23 = arith.constant 0.000000e+00 : f32
    %23 = vector.broadcast %cst_23 : f32 to vector<8x128xf32>
    %24 = arith.maximumf %22, %23 : vector<8x128xf32>
    %25 = vector.extract_strided_slice %6 {offsets = [0, 384], sizes = [8, 128], strides = [1, 1]} : vector<8x1024xf32> to vector<8x128xf32>
    %c3 = arith.constant 3 : index
    %c0_24 = arith.constant 0 : index
    %c0_25 = arith.constant 0 : index
    %26 = vector.load %arg0[%c3, %c0_24, %c0_25] : memref<8x128x128xf32, #tpu.memory_space<vmem>>, vector<1x128x128xf32>
    %27 = vector.shape_cast %26 : vector<1x128x128xf32> to vector<128x128xf32>
    %cst_26 = arith.constant dense<0.000000e+00> : vector<8x128xf32>
    %28 = tpu.matmul %25, %27, %cst_26 {dimension_numbers = #tpu.dot_dimension_numbers<[1], [0], [0], [1], [0, 0, 1, 1], [], []>} : vector<8x128xf32>, vector<128x128xf32>, vector<8x128xf32> -> vector<8x128xf32>
    %cst_27 = arith.constant 0.000000e+00 : f32
    %29 = vector.broadcast %cst_27 : f32 to vector<8x128xf32>
    %30 = arith.maximumf %28, %29 : vector<8x128xf32>
    %31 = vector.extract_strided_slice %6 {offsets = [0, 512], sizes = [8, 128], strides = [1, 1]} : vector<8x1024xf32> to vector<8x128xf32>
    %c4 = arith.constant 4 : index
    %c0_28 = arith.constant 0 : index
    %c0_29 = arith.constant 0 : index
    %32 = vector.load %arg0[%c4, %c0_28, %c0_29] : memref<8x128x128xf32, #tpu.memory_space<vmem>>, vector<1x128x128xf32>
    %33 = vector.shape_cast %32 : vector<1x128x128xf32> to vector<128x128xf32>
    %cst_30 = arith.constant dense<0.000000e+00> : vector<8x128xf32>
    %34 = tpu.matmul %31, %33, %cst_30 {dimension_numbers = #tpu.dot_dimension_numbers<[1], [0], [0], [1], [0, 0, 1, 1], [], []>} : vector<8x128xf32>, vector<128x128xf32>, vector<8x128xf32> -> vector<8x128xf32>
    %cst_31 = arith.constant 0.000000e+00 : f32
    %35 = vector.broadcast %cst_31 : f32 to vector<8x128xf32>
    %36 = arith.maximumf %34, %35 : vector<8x128xf32>
    %37 = vector.extract_strided_slice %6 {offsets = [0, 640], sizes = [8, 128], strides = [1, 1]} : vector<8x1024xf32> to vector<8x128xf32>
    %c5 = arith.constant 5 : index
    %c0_32 = arith.constant 0 : index
    %c0_33 = arith.constant 0 : index
    %38 = vector.load %arg0[%c5, %c0_32, %c0_33] : memref<8x128x128xf32, #tpu.memory_space<vmem>>, vector<1x128x128xf32>
    %39 = vector.shape_cast %38 : vector<1x128x128xf32> to vector<128x128xf32>
    %cst_34 = arith.constant dense<0.000000e+00> : vector<8x128xf32>
    %40 = tpu.matmul %37, %39, %cst_34 {dimension_numbers = #tpu.dot_dimension_numbers<[1], [0], [0], [1], [0, 0, 1, 1], [], []>} : vector<8x128xf32>, vector<128x128xf32>, vector<8x128xf32> -> vector<8x128xf32>
    %cst_35 = arith.constant 0.000000e+00 : f32
    %41 = vector.broadcast %cst_35 : f32 to vector<8x128xf32>
    %42 = arith.maximumf %40, %41 : vector<8x128xf32>
    %43 = vector.extract_strided_slice %6 {offsets = [0, 768], sizes = [8, 128], strides = [1, 1]} : vector<8x1024xf32> to vector<8x128xf32>
    %c6 = arith.constant 6 : index
    %c0_36 = arith.constant 0 : index
    %c0_37 = arith.constant 0 : index
    %44 = vector.load %arg0[%c6, %c0_36, %c0_37] : memref<8x128x128xf32, #tpu.memory_space<vmem>>, vector<1x128x128xf32>
    %45 = vector.shape_cast %44 : vector<1x128x128xf32> to vector<128x128xf32>
    %cst_38 = arith.constant dense<0.000000e+00> : vector<8x128xf32>
    %46 = tpu.matmul %43, %45, %cst_38 {dimension_numbers = #tpu.dot_dimension_numbers<[1], [0], [0], [1], [0, 0, 1, 1], [], []>} : vector<8x128xf32>, vector<128x128xf32>, vector<8x128xf32> -> vector<8x128xf32>
    %cst_39 = arith.constant 0.000000e+00 : f32
    %47 = vector.broadcast %cst_39 : f32 to vector<8x128xf32>
    %48 = arith.maximumf %46, %47 : vector<8x128xf32>
    %49 = vector.extract_strided_slice %6 {offsets = [0, 896], sizes = [8, 128], strides = [1, 1]} : vector<8x1024xf32> to vector<8x128xf32>
    %c7 = arith.constant 7 : index
    %c0_40 = arith.constant 0 : index
    %c0_41 = arith.constant 0 : index
    %50 = vector.load %arg0[%c7, %c0_40, %c0_41] : memref<8x128x128xf32, #tpu.memory_space<vmem>>, vector<1x128x128xf32>
    %51 = vector.shape_cast %50 : vector<1x128x128xf32> to vector<128x128xf32>
    %cst_42 = arith.constant dense<0.000000e+00> : vector<8x128xf32>
    %52 = tpu.matmul %49, %51, %cst_42 {dimension_numbers = #tpu.dot_dimension_numbers<[1], [0], [0], [1], [0, 0, 1, 1], [], []>} : vector<8x128xf32>, vector<128x128xf32>, vector<8x128xf32> -> vector<8x128xf32>
    %cst_43 = arith.constant 0.000000e+00 : f32
    %53 = vector.broadcast %cst_43 : f32 to vector<8x128xf32>
    %54 = arith.maximumf %52, %53 : vector<8x128xf32>
    %c0_44 = arith.constant 0 : index
    %c0_45 = arith.constant 0 : index
    %55 = vector.load %arg5[%c0_44, %c0_45] : memref<8x1xf32, #tpu.memory_space<vmem>>, vector<8x1xf32>
    %56 = vector.shape_cast %55 : vector<8x1xf32> to vector<8x1xf32>
    %57 = vector.broadcast %56 : vector<8x1xf32> to vector<8x128xf32>
    %c0_46 = arith.constant 0 : index
    %c0_47 = arith.constant 0 : index
    %58 = vector.load %arg6[%c0_46, %c0_47] : memref<8x1xf32, #tpu.memory_space<vmem>>, vector<8x1xf32>
    %59 = vector.shape_cast %58 : vector<8x1xf32> to vector<8x1xf32>
    %60 = vector.broadcast %59 : vector<8x1xf32> to vector<8x128xf32>
    %61 = tpu.concatenate %12, %57 in 0 : vector<8x128xf32>, vector<8x128xf32> -> vector<16x128xf32>
    %cst_48 = arith.constant dense<0.000000e+00> : vector<32x128xf32>
    %62 = tpu.matmul %1, %61, %cst_48 {dimension_numbers = #tpu.dot_dimension_numbers<[1], [0], [0], [1], [0, 0, 1, 1], [], []>} : vector<32x16xf32>, vector<16x128xf32>, vector<32x128xf32> -> vector<32x128xf32>
    %63 = vector.broadcast %2 : vector<32x1xf32> to vector<32x128xf32>
    %64 = arith.addf %62, %63 : vector<32x128xf32>
    %cst_49 = arith.constant 5.000000e-01 : f32
    %65 = vector.broadcast %cst_49 : f32 to vector<32x128xf32>
    %66 = arith.mulf %65, %64 : vector<32x128xf32>
    %67 = math.tanh %66 : vector<32x128xf32>
    %cst_50 = arith.constant 5.000000e-01 : f32
    %68 = vector.broadcast %cst_50 : f32 to vector<32x128xf32>
    %69 = arith.mulf %68, %67 : vector<32x128xf32>
    %cst_51 = arith.constant 5.000000e-01 : f32
    %70 = vector.broadcast %cst_51 : f32 to vector<32x128xf32>
    %71 = arith.addf %69, %70 : vector<32x128xf32>
    %72 = vector.extract_strided_slice %71 {offsets = [0, 0], sizes = [8, 128], strides = [1, 1]} : vector<32x128xf32> to vector<8x128xf32>
    %73 = vector.extract_strided_slice %71 {offsets = [8, 0], sizes = [8, 128], strides = [1, 1]} : vector<32x128xf32> to vector<8x128xf32>
    %74 = vector.extract_strided_slice %71 {offsets = [16, 0], sizes = [8, 128], strides = [1, 1]} : vector<32x128xf32> to vector<8x128xf32>
    %75 = vector.extract_strided_slice %71 {offsets = [24, 0], sizes = [8, 128], strides = [1, 1]} : vector<32x128xf32> to vector<8x128xf32>
    %76 = arith.mulf %73, %75 : vector<8x128xf32>
    %77 = arith.mulf %72, %60 : vector<8x128xf32>
    %78 = arith.addf %76, %77 : vector<8x128xf32>
    %79 = math.tanh %78 : vector<8x128xf32>
    %80 = arith.mulf %74, %79 : vector<8x128xf32>
    %81 = vector.broadcast %3 : vector<8x1xf32> to vector<8x128xf32>
    %82 = arith.mulf %80, %81 : vector<8x128xf32>
    %cst_52 = arith.constant dense<0.000000e+00> : vector<128xf32>
    %83 = vector.multi_reduction <add>, %82, %cst_52 [0] : vector<8x128xf32> to vector<128xf32>
    %84 = vector.shape_cast %83 : vector<128xf32> to vector<1x128xf32>
    %85 = vector.broadcast %4 : vector<1x1xf32> to vector<1x128xf32>
    %86 = arith.addf %84, %85 : vector<1x128xf32>
    %87 = tpu.concatenate %18, %80 in 0 : vector<8x128xf32>, vector<8x128xf32> -> vector<16x128xf32>
    %cst_53 = arith.constant dense<0.000000e+00> : vector<32x128xf32>
    %88 = tpu.matmul %1, %87, %cst_53 {dimension_numbers = #tpu.dot_dimension_numbers<[1], [0], [0], [1], [0, 0, 1, 1], [], []>} : vector<32x16xf32>, vector<16x128xf32>, vector<32x128xf32> -> vector<32x128xf32>
    %89 = vector.broadcast %2 : vector<32x1xf32> to vector<32x128xf32>
    %90 = arith.addf %88, %89 : vector<32x128xf32>
    %cst_54 = arith.constant 5.000000e-01 : f32
    %91 = vector.broadcast %cst_54 : f32 to vector<32x128xf32>
    %92 = arith.mulf %91, %90 : vector<32x128xf32>
    %93 = math.tanh %92 : vector<32x128xf32>
    %cst_55 = arith.constant 5.000000e-01 : f32
    %94 = vector.broadcast %cst_55 : f32 to vector<32x128xf32>
    %95 = arith.mulf %94, %93 : vector<32x128xf32>
    %cst_56 = arith.constant 5.000000e-01 : f32
    %96 = vector.broadcast %cst_56 : f32 to vector<32x128xf32>
    %97 = arith.addf %95, %96 : vector<32x128xf32>
    %98 = vector.extract_strided_slice %97 {offsets = [0, 0], sizes = [8, 128], strides = [1, 1]} : vector<32x128xf32> to vector<8x128xf32>
    %99 = vector.extract_strided_slice %97 {offsets = [8, 0], sizes = [8, 128], strides = [1, 1]} : vector<32x128xf32> to vector<8x128xf32>
    %100 = vector.extract_strided_slice %97 {offsets = [16, 0], sizes = [8, 128], strides = [1, 1]} : vector<32x128xf32> to vector<8x128xf32>
    %101 = vector.extract_strided_slice %97 {offsets = [24, 0], sizes = [8, 128], strides = [1, 1]} : vector<32x128xf32> to vector<8x128xf32>
    %102 = arith.mulf %99, %101 : vector<8x128xf32>
    %103 = arith.mulf %98, %78 : vector<8x128xf32>
    %104 = arith.addf %102, %103 : vector<8x128xf32>
    %105 = math.tanh %104 : vector<8x128xf32>
    %106 = arith.mulf %100, %105 : vector<8x128xf32>
    %107 = vector.broadcast %3 : vector<8x1xf32> to vector<8x128xf32>
    %108 = arith.mulf %106, %107 : vector<8x128xf32>
    %cst_57 = arith.constant dense<0.000000e+00> : vector<128xf32>
    %109 = vector.multi_reduction <add>, %108, %cst_57 [0] : vector<8x128xf32> to vector<128xf32>
    %110 = vector.shape_cast %109 : vector<128xf32> to vector<1x128xf32>
    %111 = vector.broadcast %4 : vector<1x1xf32> to vector<1x128xf32>
    %112 = arith.addf %110, %111 : vector<1x128xf32>
    %113 = tpu.concatenate %24, %106 in 0 : vector<8x128xf32>, vector<8x128xf32> -> vector<16x128xf32>
    %cst_58 = arith.constant dense<0.000000e+00> : vector<32x128xf32>
    %114 = tpu.matmul %1, %113, %cst_58 {dimension_numbers = #tpu.dot_dimension_numbers<[1], [0], [0], [1], [0, 0, 1, 1], [], []>} : vector<32x16xf32>, vector<16x128xf32>, vector<32x128xf32> -> vector<32x128xf32>
    %115 = vector.broadcast %2 : vector<32x1xf32> to vector<32x128xf32>
    %116 = arith.addf %114, %115 : vector<32x128xf32>
    %cst_59 = arith.constant 5.000000e-01 : f32
    %117 = vector.broadcast %cst_59 : f32 to vector<32x128xf32>
    %118 = arith.mulf %117, %116 : vector<32x128xf32>
    %119 = math.tanh %118 : vector<32x128xf32>
    %cst_60 = arith.constant 5.000000e-01 : f32
    %120 = vector.broadcast %cst_60 : f32 to vector<32x128xf32>
    %121 = arith.mulf %120, %119 : vector<32x128xf32>
    %cst_61 = arith.constant 5.000000e-01 : f32
    %122 = vector.broadcast %cst_61 : f32 to vector<32x128xf32>
    %123 = arith.addf %121, %122 : vector<32x128xf32>
    %124 = vector.extract_strided_slice %123 {offsets = [0, 0], sizes = [8, 128], strides = [1, 1]} : vector<32x128xf32> to vector<8x128xf32>
    %125 = vector.extract_strided_slice %123 {offsets = [8, 0], sizes = [8, 128], strides = [1, 1]} : vector<32x128xf32> to vector<8x128xf32>
    %126 = vector.extract_strided_slice %123 {offsets = [16, 0], sizes = [8, 128], strides = [1, 1]} : vector<32x128xf32> to vector<8x128xf32>
    %127 = vector.extract_strided_slice %123 {offsets = [24, 0], sizes = [8, 128], strides = [1, 1]} : vector<32x128xf32> to vector<8x128xf32>
    %128 = arith.mulf %125, %127 : vector<8x128xf32>
    %129 = arith.mulf %124, %104 : vector<8x128xf32>
    %130 = arith.addf %128, %129 : vector<8x128xf32>
    %131 = math.tanh %130 : vector<8x128xf32>
    %132 = arith.mulf %126, %131 : vector<8x128xf32>
    %133 = vector.broadcast %3 : vector<8x1xf32> to vector<8x128xf32>
    %134 = arith.mulf %132, %133 : vector<8x128xf32>
    %cst_62 = arith.constant dense<0.000000e+00> : vector<128xf32>
    %135 = vector.multi_reduction <add>, %134, %cst_62 [0] : vector<8x128xf32> to vector<128xf32>
    %136 = vector.shape_cast %135 : vector<128xf32> to vector<1x128xf32>
    %137 = vector.broadcast %4 : vector<1x1xf32> to vector<1x128xf32>
    %138 = arith.addf %136, %137 : vector<1x128xf32>
    %139 = tpu.concatenate %30, %132 in 0 : vector<8x128xf32>, vector<8x128xf32> -> vector<16x128xf32>
    %cst_63 = arith.constant dense<0.000000e+00> : vector<32x128xf32>
    %140 = tpu.matmul %1, %139, %cst_63 {dimension_numbers = #tpu.dot_dimension_numbers<[1], [0], [0], [1], [0, 0, 1, 1], [], []>} : vector<32x16xf32>, vector<16x128xf32>, vector<32x128xf32> -> vector<32x128xf32>
    %141 = vector.broadcast %2 : vector<32x1xf32> to vector<32x128xf32>
    %142 = arith.addf %140, %141 : vector<32x128xf32>
    %cst_64 = arith.constant 5.000000e-01 : f32
    %143 = vector.broadcast %cst_64 : f32 to vector<32x128xf32>
    %144 = arith.mulf %143, %142 : vector<32x128xf32>
    %145 = math.tanh %144 : vector<32x128xf32>
    %cst_65 = arith.constant 5.000000e-01 : f32
    %146 = vector.broadcast %cst_65 : f32 to vector<32x128xf32>
    %147 = arith.mulf %146, %145 : vector<32x128xf32>
    %cst_66 = arith.constant 5.000000e-01 : f32
    %148 = vector.broadcast %cst_66 : f32 to vector<32x128xf32>
    %149 = arith.addf %147, %148 : vector<32x128xf32>
    %150 = vector.extract_strided_slice %149 {offsets = [0, 0], sizes = [8, 128], strides = [1, 1]} : vector<32x128xf32> to vector<8x128xf32>
    %151 = vector.extract_strided_slice %149 {offsets = [8, 0], sizes = [8, 128], strides = [1, 1]} : vector<32x128xf32> to vector<8x128xf32>
    %152 = vector.extract_strided_slice %149 {offsets = [16, 0], sizes = [8, 128], strides = [1, 1]} : vector<32x128xf32> to vector<8x128xf32>
    %153 = vector.extract_strided_slice %149 {offsets = [24, 0], sizes = [8, 128], strides = [1, 1]} : vector<32x128xf32> to vector<8x128xf32>
    %154 = arith.mulf %151, %153 : vector<8x128xf32>
    %155 = arith.mulf %150, %130 : vector<8x128xf32>
    %156 = arith.addf %154, %155 : vector<8x128xf32>
    %157 = math.tanh %156 : vector<8x128xf32>
    %158 = arith.mulf %152, %157 : vector<8x128xf32>
    %159 = vector.broadcast %3 : vector<8x1xf32> to vector<8x128xf32>
    %160 = arith.mulf %158, %159 : vector<8x128xf32>
    %cst_67 = arith.constant dense<0.000000e+00> : vector<128xf32>
    %161 = vector.multi_reduction <add>, %160, %cst_67 [0] : vector<8x128xf32> to vector<128xf32>
    %162 = vector.shape_cast %161 : vector<128xf32> to vector<1x128xf32>
    %163 = vector.broadcast %4 : vector<1x1xf32> to vector<1x128xf32>
    %164 = arith.addf %162, %163 : vector<1x128xf32>
    %165 = tpu.concatenate %36, %158 in 0 : vector<8x128xf32>, vector<8x128xf32> -> vector<16x128xf32>
    %cst_68 = arith.constant dense<0.000000e+00> : vector<32x128xf32>
    %166 = tpu.matmul %1, %165, %cst_68 {dimension_numbers = #tpu.dot_dimension_numbers<[1], [0], [0], [1], [0, 0, 1, 1], [], []>} : vector<32x16xf32>, vector<16x128xf32>, vector<32x128xf32> -> vector<32x128xf32>
    %167 = vector.broadcast %2 : vector<32x1xf32> to vector<32x128xf32>
    %168 = arith.addf %166, %167 : vector<32x128xf32>
    %cst_69 = arith.constant 5.000000e-01 : f32
    %169 = vector.broadcast %cst_69 : f32 to vector<32x128xf32>
    %170 = arith.mulf %169, %168 : vector<32x128xf32>
    %171 = math.tanh %170 : vector<32x128xf32>
    %cst_70 = arith.constant 5.000000e-01 : f32
    %172 = vector.broadcast %cst_70 : f32 to vector<32x128xf32>
    %173 = arith.mulf %172, %171 : vector<32x128xf32>
    %cst_71 = arith.constant 5.000000e-01 : f32
    %174 = vector.broadcast %cst_71 : f32 to vector<32x128xf32>
    %175 = arith.addf %173, %174 : vector<32x128xf32>
    %176 = vector.extract_strided_slice %175 {offsets = [0, 0], sizes = [8, 128], strides = [1, 1]} : vector<32x128xf32> to vector<8x128xf32>
    %177 = vector.extract_strided_slice %175 {offsets = [8, 0], sizes = [8, 128], strides = [1, 1]} : vector<32x128xf32> to vector<8x128xf32>
    %178 = vector.extract_strided_slice %175 {offsets = [16, 0], sizes = [8, 128], strides = [1, 1]} : vector<32x128xf32> to vector<8x128xf32>
    %179 = vector.extract_strided_slice %175 {offsets = [24, 0], sizes = [8, 128], strides = [1, 1]} : vector<32x128xf32> to vector<8x128xf32>
    %180 = arith.mulf %177, %179 : vector<8x128xf32>
    %181 = arith.mulf %176, %156 : vector<8x128xf32>
    %182 = arith.addf %180, %181 : vector<8x128xf32>
    %183 = math.tanh %182 : vector<8x128xf32>
    %184 = arith.mulf %178, %183 : vector<8x128xf32>
    %185 = vector.broadcast %3 : vector<8x1xf32> to vector<8x128xf32>
    %186 = arith.mulf %184, %185 : vector<8x128xf32>
    %cst_72 = arith.constant dense<0.000000e+00> : vector<128xf32>
    %187 = vector.multi_reduction <add>, %186, %cst_72 [0] : vector<8x128xf32> to vector<128xf32>
    %188 = vector.shape_cast %187 : vector<128xf32> to vector<1x128xf32>
    %189 = vector.broadcast %4 : vector<1x1xf32> to vector<1x128xf32>
    %190 = arith.addf %188, %189 : vector<1x128xf32>
    %191 = tpu.concatenate %42, %184 in 0 : vector<8x128xf32>, vector<8x128xf32> -> vector<16x128xf32>
    %cst_73 = arith.constant dense<0.000000e+00> : vector<32x128xf32>
    %192 = tpu.matmul %1, %191, %cst_73 {dimension_numbers = #tpu.dot_dimension_numbers<[1], [0], [0], [1], [0, 0, 1, 1], [], []>} : vector<32x16xf32>, vector<16x128xf32>, vector<32x128xf32> -> vector<32x128xf32>
    %193 = vector.broadcast %2 : vector<32x1xf32> to vector<32x128xf32>
    %194 = arith.addf %192, %193 : vector<32x128xf32>
    %cst_74 = arith.constant 5.000000e-01 : f32
    %195 = vector.broadcast %cst_74 : f32 to vector<32x128xf32>
    %196 = arith.mulf %195, %194 : vector<32x128xf32>
    %197 = math.tanh %196 : vector<32x128xf32>
    %cst_75 = arith.constant 5.000000e-01 : f32
    %198 = vector.broadcast %cst_75 : f32 to vector<32x128xf32>
    %199 = arith.mulf %198, %197 : vector<32x128xf32>
    %cst_76 = arith.constant 5.000000e-01 : f32
    %200 = vector.broadcast %cst_76 : f32 to vector<32x128xf32>
    %201 = arith.addf %199, %200 : vector<32x128xf32>
    %202 = vector.extract_strided_slice %201 {offsets = [0, 0], sizes = [8, 128], strides = [1, 1]} : vector<32x128xf32> to vector<8x128xf32>
    %203 = vector.extract_strided_slice %201 {offsets = [8, 0], sizes = [8, 128], strides = [1, 1]} : vector<32x128xf32> to vector<8x128xf32>
    %204 = vector.extract_strided_slice %201 {offsets = [16, 0], sizes = [8, 128], strides = [1, 1]} : vector<32x128xf32> to vector<8x128xf32>
    %205 = vector.extract_strided_slice %201 {offsets = [24, 0], sizes = [8, 128], strides = [1, 1]} : vector<32x128xf32> to vector<8x128xf32>
    %206 = arith.mulf %203, %205 : vector<8x128xf32>
    %207 = arith.mulf %202, %182 : vector<8x128xf32>
    %208 = arith.addf %206, %207 : vector<8x128xf32>
    %209 = math.tanh %208 : vector<8x128xf32>
    %210 = arith.mulf %204, %209 : vector<8x128xf32>
    %211 = vector.broadcast %3 : vector<8x1xf32> to vector<8x128xf32>
    %212 = arith.mulf %210, %211 : vector<8x128xf32>
    %cst_77 = arith.constant dense<0.000000e+00> : vector<128xf32>
    %213 = vector.multi_reduction <add>, %212, %cst_77 [0] : vector<8x128xf32> to vector<128xf32>
    %214 = vector.shape_cast %213 : vector<128xf32> to vector<1x128xf32>
    %215 = vector.broadcast %4 : vector<1x1xf32> to vector<1x128xf32>
    %216 = arith.addf %214, %215 : vector<1x128xf32>
    %217 = tpu.concatenate %48, %210 in 0 : vector<8x128xf32>, vector<8x128xf32> -> vector<16x128xf32>
    %cst_78 = arith.constant dense<0.000000e+00> : vector<32x128xf32>
    %218 = tpu.matmul %1, %217, %cst_78 {dimension_numbers = #tpu.dot_dimension_numbers<[1], [0], [0], [1], [0, 0, 1, 1], [], []>} : vector<32x16xf32>, vector<16x128xf32>, vector<32x128xf32> -> vector<32x128xf32>
    %219 = vector.broadcast %2 : vector<32x1xf32> to vector<32x128xf32>
    %220 = arith.addf %218, %219 : vector<32x128xf32>
    %cst_79 = arith.constant 5.000000e-01 : f32
    %221 = vector.broadcast %cst_79 : f32 to vector<32x128xf32>
    %222 = arith.mulf %221, %220 : vector<32x128xf32>
    %223 = math.tanh %222 : vector<32x128xf32>
    %cst_80 = arith.constant 5.000000e-01 : f32
    %224 = vector.broadcast %cst_80 : f32 to vector<32x128xf32>
    %225 = arith.mulf %224, %223 : vector<32x128xf32>
    %cst_81 = arith.constant 5.000000e-01 : f32
    %226 = vector.broadcast %cst_81 : f32 to vector<32x128xf32>
    %227 = arith.addf %225, %226 : vector<32x128xf32>
    %228 = vector.extract_strided_slice %227 {offsets = [0, 0], sizes = [8, 128], strides = [1, 1]} : vector<32x128xf32> to vector<8x128xf32>
    %229 = vector.extract_strided_slice %227 {offsets = [8, 0], sizes = [8, 128], strides = [1, 1]} : vector<32x128xf32> to vector<8x128xf32>
    %230 = vector.extract_strided_slice %227 {offsets = [16, 0], sizes = [8, 128], strides = [1, 1]} : vector<32x128xf32> to vector<8x128xf32>
    %231 = vector.extract_strided_slice %227 {offsets = [24, 0], sizes = [8, 128], strides = [1, 1]} : vector<32x128xf32> to vector<8x128xf32>
    %232 = arith.mulf %229, %231 : vector<8x128xf32>
    %233 = arith.mulf %228, %208 : vector<8x128xf32>
    %234 = arith.addf %232, %233 : vector<8x128xf32>
    %235 = math.tanh %234 : vector<8x128xf32>
    %236 = arith.mulf %230, %235 : vector<8x128xf32>
    %237 = vector.broadcast %3 : vector<8x1xf32> to vector<8x128xf32>
    %238 = arith.mulf %236, %237 : vector<8x128xf32>
    %cst_82 = arith.constant dense<0.000000e+00> : vector<128xf32>
    %239 = vector.multi_reduction <add>, %238, %cst_82 [0] : vector<8x128xf32> to vector<128xf32>
    %240 = vector.shape_cast %239 : vector<128xf32> to vector<1x128xf32>
    %241 = vector.broadcast %4 : vector<1x1xf32> to vector<1x128xf32>
    %242 = arith.addf %240, %241 : vector<1x128xf32>
    %243 = tpu.concatenate %54, %236 in 0 : vector<8x128xf32>, vector<8x128xf32> -> vector<16x128xf32>
    %cst_83 = arith.constant dense<0.000000e+00> : vector<32x128xf32>
    %244 = tpu.matmul %1, %243, %cst_83 {dimension_numbers = #tpu.dot_dimension_numbers<[1], [0], [0], [1], [0, 0, 1, 1], [], []>} : vector<32x16xf32>, vector<16x128xf32>, vector<32x128xf32> -> vector<32x128xf32>
    %245 = vector.broadcast %2 : vector<32x1xf32> to vector<32x128xf32>
    %246 = arith.addf %244, %245 : vector<32x128xf32>
    %cst_84 = arith.constant 5.000000e-01 : f32
    %247 = vector.broadcast %cst_84 : f32 to vector<32x128xf32>
    %248 = arith.mulf %247, %246 : vector<32x128xf32>
    %249 = math.tanh %248 : vector<32x128xf32>
    %cst_85 = arith.constant 5.000000e-01 : f32
    %250 = vector.broadcast %cst_85 : f32 to vector<32x128xf32>
    %251 = arith.mulf %250, %249 : vector<32x128xf32>
    %cst_86 = arith.constant 5.000000e-01 : f32
    %252 = vector.broadcast %cst_86 : f32 to vector<32x128xf32>
    %253 = arith.addf %251, %252 : vector<32x128xf32>
    %254 = vector.extract_strided_slice %253 {offsets = [0, 0], sizes = [8, 128], strides = [1, 1]} : vector<32x128xf32> to vector<8x128xf32>
    %255 = vector.extract_strided_slice %253 {offsets = [8, 0], sizes = [8, 128], strides = [1, 1]} : vector<32x128xf32> to vector<8x128xf32>
    %256 = vector.extract_strided_slice %253 {offsets = [16, 0], sizes = [8, 128], strides = [1, 1]} : vector<32x128xf32> to vector<8x128xf32>
    %257 = vector.extract_strided_slice %253 {offsets = [24, 0], sizes = [8, 128], strides = [1, 1]} : vector<32x128xf32> to vector<8x128xf32>
    %258 = arith.mulf %255, %257 : vector<8x128xf32>
    %259 = arith.mulf %254, %234 : vector<8x128xf32>
    %260 = arith.addf %258, %259 : vector<8x128xf32>
    %261 = math.tanh %260 : vector<8x128xf32>
    %262 = arith.mulf %256, %261 : vector<8x128xf32>
    %263 = vector.broadcast %3 : vector<8x1xf32> to vector<8x128xf32>
    %264 = arith.mulf %262, %263 : vector<8x128xf32>
    %cst_87 = arith.constant dense<0.000000e+00> : vector<128xf32>
    %265 = vector.multi_reduction <add>, %264, %cst_87 [0] : vector<8x128xf32> to vector<128xf32>
    %266 = vector.shape_cast %265 : vector<128xf32> to vector<1x128xf32>
    %267 = vector.broadcast %4 : vector<1x1xf32> to vector<1x128xf32>
    %268 = arith.addf %266, %267 : vector<1x128xf32>
    %269 = tpu.concatenate %86, %112, %138, %164, %190, %216, %242, %268 in 0 : vector<1x128xf32>, vector<1x128xf32>, vector<1x128xf32>, vector<1x128xf32>, vector<1x128xf32>, vector<1x128xf32>, vector<1x128xf32>, vector<1x128xf32> -> vector<8x128xf32>
    %c0_88 = arith.constant 0 : index
    %c0_89 = arith.constant 0 : index
    %270 = vector.load %arg9[%c0_88, %c0_89] : memref<8x128xf32, #tpu.memory_space<vmem>>, vector<8x128xf32>
    tpu.vector_store %arg9[%c0_88, %c0_89], %269 {strides = array<i32>} : memref<8x128xf32, #tpu.memory_space<vmem>>, vector<8x128xf32>,
    return
  }
}

</mosaic_0001>

<llo_original>
// kernel: tpu_custom_call.1
$region0: #{tpu_custom_call.1}
  #allocation0 [shape = 'u32[]', space=smem, size = 0x4, offset = 0x4, fixed_abs, tag = 'smem constant byte address 0x4 - core index']
  #allocation1 [shape = 'u32[144,128]{1,0:T(1,128)}', space=vmem, size = 0x12000, scoped, tag = 'internal scratch']
  #allocation2 [shape = 'f32[1,1]{1,0:T(1,128)S(1)}', space=vmem, size = 0x200, scoped, tag = 'scoped memory for tpu_custom_call.1']
  %s0 = inlined_call_operand.hbm [shape: f32[8,128,128], index: 0, kind: input, shape index: {}]
  %s1 = inlined_call_operand.hbm [shape: f32[16,1024], index: 1, kind: input, shape index: {}]
  %s2 = inlined_call_operand.vmem [shape: f32[8,16], index: 2, kind: input, shape index: {}]
  %s3 = inlined_call_operand.vmem [shape: f32[32,16], index: 3, kind: input, shape index: {}]
  %s4 = inlined_call_operand.vmem [shape: f32[32,1], index: 4, kind: input, shape index: {}]
  %s5 = inlined_call_operand.vmem [shape: f32[8,1], index: 5, kind: input, shape index: {}]
  %s6 = inlined_call_operand.vmem [shape: f32[8,1], index: 6, kind: input, shape index: {}]
  %s7 = inlined_call_operand.vmem [shape: f32[8,1], index: 7, kind: input, shape index: {}]
  %s8 = inlined_call_operand.<no memory space> [shape: f32[1,1], index: 8, kind: input, shape index: {}]
  %s9 = inlined_call_operand.hbm [shape: f32[8,128], index: 9, kind: output, shape index: {}]
  %s10 = sld [smem:[#allocation0]]
  $region54: #{tpu_custom_call.1} parent=0
    _
  %s12 = ssub.s32 1, %s10
  %s13 = scalar_select 0, %s12, %s10
  %v14 = vstv %s8
  %15 = vst [vmem:[#allocation2] sm:$0x1] %v14
  $region1: #{tpu_custom_call.1} parent=0
    #allocation3 [shape = 'u8[524288]{0}', space=vmem, size = 0x80000, scoped, tag = 'input window, operand 0, single buffered']
    #allocation4 [shape = 's32[1]{0}', space=sflag, size = 0x4, scoped, tag = 'scoped memory for tpu_custom_call.1']
    #allocation5 [shape = 's32[1]{0}', space=sflag, size = 0x4, scoped, tag = 'scoped memory for tpu_custom_call.1']
    #allocation6 [shape = 'u8[65536]{0}', space=vmem, size = 0x10000, scoped, tag = 'input window, operand 1, single buffered']
    #allocation7 [shape = 's32[1]{0}', space=sflag, size = 0x4, scoped, tag = 'scoped memory for tpu_custom_call.1']
    #allocation8 [shape = 'u8[4096]{0}', space=vmem, size = 0x1000, scoped, tag = 'output window, operand 0, single buffered']
    %16 = vsyncpa [#allocation4], 0
    %17 = vsyncpa [#allocation7], 0
    %18 = vsyncpa [#allocation5], 0
    // Predicated region
    $region2: #{tpu_custom_call.1} parent=1 // pred_check
      _
    $region3: #{tpu_custom_call.1} parent=1 // pred_check_branch
      %20 = sbr.rel (0) target = $region5
    $region4: #{tpu_custom_call.1} parent=1 // pred_region
      %s22 = ssub.s32 16384, 16384
      %23 = vsyncadd [#allocation4], %s22
      %s24 = sshll.u32 [#allocation3], 4
      %s25 = int_to_ptr.vmem [resolvable:$true] %s24
      %30 = dma.hbm_to_vmem [thread:$0]  %s0, 16384, %s25, [#allocation4], 128, 128, 8
    $region5: #{tpu_custom_call.1} parent=1 // pred_fallthru
      _
    // Predicated region
    $region6: #{tpu_custom_call.1} parent=1 // pred_check
      _
    $region7: #{tpu_custom_call.1} parent=1 // pred_check_branch
      %32 = sbr.rel (0) target = $region9
    $region8: #{tpu_custom_call.1} parent=1 // pred_region
      %s34 = ssub.s32 2048, 2048
      %35 = vsyncadd [#allocation7], %s34
      %s36 = sshll.u32 [#allocation6], 4
      %s37 = int_to_ptr.vmem [resolvable:$true] %s36
      %42 = dma.hbm_to_vmem [thread:$0]  %s1, 2048, %s37, [#allocation7], 1024, 1024, 64
    $region9: #{tpu_custom_call.1} parent=1 // pred_fallthru
      _
    // Predicated region
    $region10: #{tpu_custom_call.1} parent=1 // pred_check
      _
    $region11: #{tpu_custom_call.1} parent=1 // pred_check_branch
      %44 = sbr.rel (0) target = $region13
    $region12: #{tpu_custom_call.1} parent=1 // pred_region
      _
    $region13: #{tpu_custom_call.1} parent=1 // pred_fallthru
      _
    // Predicated region
    $region14: #{tpu_custom_call.1} parent=1 // pred_check
      _
    $region15: #{tpu_custom_call.1} parent=1 // pred_check_branch
      %46 = sbr.rel (0) target = $region17
    $region16: #{tpu_custom_call.1} parent=1 // pred_region
      _
    $region17: #{tpu_custom_call.1} parent=1 // pred_fallthru
      _
    // Predicated region
    $region18: #{tpu_custom_call.1} parent=1 // pred_check
      _
    $region19: #{tpu_custom_call.1} parent=1 // pred_check_branch
      %48 = sbr.rel (0) target = $region21
    $region20: #{tpu_custom_call.1} parent=1 // pred_region
      _
    $region21: #{tpu_custom_call.1} parent=1 // pred_fallthru
      _
    // Predicated region
    $region22: #{tpu_custom_call.1} parent=1 // pred_check
      _
    $region23: #{tpu_custom_call.1} parent=1 // pred_check_branch
      %50 = sbr.rel (0) target = $region25
    $region24: #{tpu_custom_call.1} parent=1 // pred_region
      _
    $region25: #{tpu_custom_call.1} parent=1 // pred_fallthru
      _
    // Predicated region
    $region26: #{tpu_custom_call.1} parent=1 // pred_check
      _
    $region27: #{tpu_custom_call.1} parent=1 // pred_check_branch
      %52 = sbr.rel (0) target = $region29
    $region28: #{tpu_custom_call.1} parent=1 // pred_region
      _
    $region29: #{tpu_custom_call.1} parent=1 // pred_fallthru
      _
    // Predicated region
    $region30: #{tpu_custom_call.1} parent=1 // pred_check
      _
    $region31: #{tpu_custom_call.1} parent=1 // pred_check_branch
      %54 = sbr.rel (0) target = $region33
    $region32: #{tpu_custom_call.1} parent=1 // pred_region
      _
    $region33: #{tpu_custom_call.1} parent=1 // pred_fallthru
      _
    // Predicated region
    $region34: #{tpu_custom_call.1} parent=1 // pred_check
      _
    $region35: #{tpu_custom_call.1} parent=1 // pred_check_branch
      %56 = sbr.rel (0) target = $region37
    $region36: #{tpu_custom_call.1} parent=1 // pred_region
      _
    $region37: #{tpu_custom_call.1} parent=1 // pred_fallthru
      _
    // Predicated region
    $region38: #{tpu_custom_call.1} parent=1 // pred_check
      _
    $region39: #{tpu_custom_call.1} parent=1 // pred_check_branch
      %58 = sbr.rel (0) target = $region41
    $region40: #{tpu_custom_call.1} parent=1 // pred_region
      %59 = dma.done [#allocation4], 16384
    $region41: #{tpu_custom_call.1} parent=1 // pred_fallthru
      _
    // Predicated region
    $region42: #{tpu_custom_call.1} parent=1 // pred_check
      _
    $region43: #{tpu_custom_call.1} parent=1 // pred_check_branch
      %61 = sbr.rel (0) target = $region45
    $region44: #{tpu_custom_call.1} parent=1 // pred_region
      %62 = dma.done [#allocation7], 2048
    $region45: #{tpu_custom_call.1} parent=1 // pred_fallthru
      _
    %v63 = vld [vmem:[%s2] sm:$0xff]
    %v64 = vld [vmem:[%s3] sm:$0xff]
    %v65 = vld [vmem:[%s3 + $0x8] sm:$0xff]
    %v66 = vld [vmem:[%s3 + $0x10] sm:$0xff]
    %v67 = vld [vmem:[%s3 + $0x18] sm:$0xff]
    %v68 = vld [vmem:[%s4] sm:$0xff]
    %v69 = vld [vmem:[%s4 + $0x8] sm:$0xff]
    %v70 = vld [vmem:[%s4 + $0x10] sm:$0xff]
    %v71 = vld [vmem:[%s4 + $0x18] sm:$0xff]
    %v72 = vld [vmem:[%s7] sm:$0xff]
    %v73 = vld [vmem:[#allocation2] sm:$0x1]
    %v74 = vld [vmem:[#allocation6] sm:$0xff]
    %v75 = vld [vmem:[#allocation6 + $0x8] sm:$0xff]
    %v76 = vld [vmem:[#allocation6 + $0x10] sm:$0xff]
    %v77 = vld [vmem:[#allocation6 + $0x18] sm:$0xff]
    %v78 = vld [vmem:[#allocation6 + $0x20] sm:$0xff]
    %v79 = vld [vmem:[#allocation6 + $0x28] sm:$0xff]
    %v80 = vld [vmem:[#allocation6 + $0x30] sm:$0xff]
    %v81 = vld [vmem:[#allocation6 + $0x38] sm:$0xff]
    %v82 = vld [vmem:[#allocation6 + $0x40] sm:$0xff]
    %v83 = vld [vmem:[#allocation6 + $0x48] sm:$0xff]
    %v84 = vld [vmem:[#allocation6 + $0x50] sm:$0xff]
    %v85 = vld [vmem:[#allocation6 + $0x58] sm:$0xff]
    %v86 = vld [vmem:[#allocation6 + $0x60] sm:$0xff]
    %v87 = vld [vmem:[#allocation6 + $0x68] sm:$0xff]
    %v88 = vld [vmem:[#allocation6 + $0x70] sm:$0xff]
    %v89 = vld [vmem:[#allocation6 + $0x78] sm:$0xff]
    %vm90 = vcmask 130048
    %v92 = vsel %vm90, %v63, 0
    %94 = vmatprep.subr.mxu0 0.0
    %95 = vmatpush1.msra.mxu0 0.0
    %96 = vmatprep.subr.mxu0 0.0
    %97 = vmatpush1.msra.mxu0 0.0
    %98 = vmatprep.subr.mxu0 0.0
    %99 = vmatpush1.msra.mxu0 0.0
    %100 = vmatprep.subr.mxu0 0.0
    %101 = vmatpush1.msra.mxu0 0.0
    %102 = vmatprep.subr.mxu0 0.0
    %103 = vmatpush1.msra.mxu0 0.0
    %104 = vmatprep.subr.mxu0 0.0
    %105 = vmatpush1.msra.mxu0 0.0
    %106 = vmatprep.subr.mxu0 0.0
    %107 = vmatpush1.msra.mxu0 0.0
    %108 = vmatprep.subr.mxu0 0.0
    %109 = vmatpush1.msra.mxu0 0.0
    %110 = vmatprep.subr.mxu0 0.0
    %111 = vmatpush1.msra.mxu0 0.0
    %112 = vmatprep.subr.mxu0 0.0
    %113 = vmatpush1.msra.mxu0 0.0
    %114 = vmatprep.subr.mxu0 0.0
    %115 = vmatpush1.msra.mxu0 0.0
    %116 = vmatprep.subr.mxu0 0.0
    %117 = vmatpush1.msra.mxu0 0.0
    %118 = vmatprep.subr.mxu0 0.0
    %119 = vmatpush1.msra.mxu0 0.0
    %120 = vmatprep.subr.mxu0 0.0
    %121 = vmatpush1.msra.mxu0 0.0
    %122 = vmatprep.subr.mxu0 %v83
    %123 = vmatpush1.msra.mxu0 %v82
    %124 = vmatprep.subr.mxu0 %v75
    %125 = vmatpush1.msra.mxu0 %v74
    %126 = vmatprep.subr.mxu0 0.0
    %127 = vmatpush2.msra.mxu0 0.0
    %128 = vmatprep.subr.mxu0 0.0
    %129 = vmatpush2.msra.mxu0 0.0
    %130 = vmatprep.subr.mxu0 0.0
    %131 = vmatpush2.msra.mxu0 0.0
    %132 = vmatprep.subr.mxu0 0.0
    %133 = vmatpush2.msra.mxu0 0.0
    %134 = vmatprep.subr.mxu0 0.0
    %135 = vmatpush2.msra.mxu0 0.0
    %136 = vmatprep.subr.mxu0 0.0
    %137 = vmatpush2.msra.mxu0 0.0
    %138 = vmatprep.subr.mxu0 0.0
    %139 = vmatpush2.msra.mxu0 0.0
    %140 = vmatprep.subr.mxu0 0.0
    %141 = vmatpush2.msra.mxu0 0.0
    %142 = vmatprep.subr.mxu0 0.0
    %143 = vmatpush2.msra.mxu0 0.0
    %144 = vmatprep.subr.mxu0 0.0
    %145 = vmatpush2.msra.mxu0 0.0
    %146 = vmatprep.subr.mxu0 0.0
    %147 = vmatpush2.msra.mxu0 0.0
    %148 = vmatprep.subr.mxu0 0.0
    %149 = vmatpush2.msra.mxu0 0.0
    %150 = vmatprep.subr.mxu0 0.0
    %151 = vmatpush2.msra.mxu0 0.0
    %152 = vmatprep.subr.mxu0 0.0
    %153 = vmatpush2.msra.mxu0 0.0
    %154 = vmatprep.subr.mxu0 0.0
    %155 = vmatpush2.msra.mxu0 0.0
    %156 = vmatprep.subr.mxu0 0.0
    %157 = vmatpush2.msra.mxu0 0.0
    %158 = vmatprep.mubr.f32.mxu0 0.0
    %159 = vmatmul.mubr.f32.gmra.mxu0 %v92
    %v160 = vpop.f32.mrf.mxu0
    %v161 = vadd.f32 0.0, %v160
    %v162 = vpop.f32.mrf.mxu0
    %v163 = vadd.f32 0.0, %v162
    %164 = vdwg.mxu0
    %165 = vmatprep.subr.mxu0 0.0
    %166 = vmatpush1.msra.mxu0 0.0
    %167 = vmatprep.subr.mxu0 0.0
    %168 = vmatpush1.msra.mxu0 0.0
    %169 = vmatprep.subr.mxu0 0.0
    %170 = vmatpush1.msra.mxu0 0.0
    %171 = vmatprep.subr.mxu0 0.0
    %172 = vmatpush1.msra.mxu0 0.0
    %173 = vmatprep.subr.mxu0 0.0
    %174 = vmatpush1.msra.mxu0 0.0
    %175 = vmatprep.subr.mxu0 0.0
    %176 = vmatpush1.msra.mxu0 0.0
    %177 = vmatprep.subr.mxu0 0.0
    %178 = vmatpush1.msra.mxu0 0.0
    %179 = vmatprep.subr.mxu0 0.0
    %180 = vmatpush1.msra.mxu0 0.0
    %181 = vmatprep.subr.mxu0 0.0
    %182 = vmatpush1.msra.mxu0 0.0
    %183 = vmatprep.subr.mxu0 0.0
    %184 = vmatpush1.msra.mxu0 0.0
    %185 = vmatprep.subr.mxu0 0.0
    %186 = vmatpush1.msra.mxu0 0.0
    %187 = vmatprep.subr.mxu0 0.0
    %188 = vmatpush1.msra.mxu0 0.0
    %189 = vmatprep.subr.mxu0 0.0
    %190 = vmatpush1.msra.mxu0 0.0
    %191 = vmatprep.subr.mxu0 0.0
    %192 = vmatpush1.msra.mxu0 0.0
    %193 = vmatprep.subr.mxu0 %v85
    %194 = vmatpush1.msra.mxu0 %v84
    %195 = vmatprep.subr.mxu0 %v77
    %196 = vmatpush1.msra.mxu0 %v76
    %197 = vmatprep.subr.mxu0 0.0
    %198 = vmatpush2.msra.mxu0 0.0
    %199 = vmatprep.subr.mxu0 0.0
    %200 = vmatpush2.msra.mxu0 0.0
    %201 = vmatprep.subr.mxu0 0.0
    %202 = vmatpush2.msra.mxu0 0.0
    %203 = vmatprep.subr.mxu0 0.0
    %204 = vmatpush2.msra.mxu0 0.0
    %205 = vmatprep.subr.mxu0 0.0
    %206 = vmatpush2.msra.mxu0 0.0
    %207 = vmatprep.subr.mxu0 0.0
    %208 = vmatpush2.msra.mxu0 0.0
    %209 = vmatprep.subr.mxu0 0.0
    %210 = vmatpush2.msra.mxu0 0.0
    %211 = vmatprep.subr.mxu0 0.0
    %212 = vmatpush2.msra.mxu0 0.0
    %213 = vmatprep.subr.mxu0 0.0
    %214 = vmatpush2.msra.mxu0 0.0
    %215 = vmatprep.subr.mxu0 0.0
    %216 = vmatpush2.msra.mxu0 0.0
    %217 = vmatprep.subr.mxu0 0.0
    %218 = vmatpush2.msra.mxu0 0.0
    %219 = vmatprep.subr.mxu0 0.0
    %220 = vmatpush2.msra.mxu0 0.0
    %221 = vmatprep.subr.mxu0 0.0
    %222 = vmatpush2.msra.mxu0 0.0
    %223 = vmatprep.subr.mxu0 0.0
    %224 = vmatpush2.msra.mxu0 0.0
    %225 = vmatprep.subr.mxu0 0.0
    %226 = vmatpush2.msra.mxu0 0.0
    %227 = vmatprep.subr.mxu0 0.0
    %228 = vmatpush2.msra.mxu0 0.0
    %229 = vmatprep.mubr.f32.mxu0 0.0
    %230 = vmatmul.mubr.f32.gmra.mxu0 %v92
    %v231 = vpop.f32.mrf.mxu0
    %v232 = vadd.f32 0.0, %v231
    %v233 = vpop.f32.mrf.mxu0
    %v234 = vadd.f32 0.0, %v233
    %235 = vdwg.mxu0
    %236 = vmatprep.subr.mxu0 0.0
    %237 = vmatpush1.msra.mxu0 0.0
    %238 = vmatprep.subr.mxu0 0.0
    %239 = vmatpush1.msra.mxu0 0.0
    %240 = vmatprep.subr.mxu0 0.0
    %241 = vmatpush1.msra.mxu0 0.0
    %242 = vmatprep.subr.mxu0 0.0
    %243 = vmatpush1.msra.mxu0 0.0
    %244 = vmatprep.subr.mxu0 0.0
    %245 = vmatpush1.msra.mxu0 0.0
    %246 = vmatprep.subr.mxu0 0.0
    %247 = vmatpush1.msra.mxu0 0.0
    %248 = vmatprep.subr.mxu0 0.0
    %249 = vmatpush1.msra.mxu0 0.0
    %250 = vmatprep.subr.mxu0 0.0
    %251 = vmatpush1.msra.mxu0 0.0
    %252 = vmatprep.subr.mxu0 0.0
    %253 = vmatpush1.msra.mxu0 0.0
    %254 = vmatprep.subr.mxu0 0.0
    %255 = vmatpush1.msra.mxu0 0.0
    %256 = vmatprep.subr.mxu0 0.0
    %257 = vmatpush1.msra.mxu0 0.0
    %258 = vmatprep.subr.mxu0 0.0
    %259 = vmatpush1.msra.mxu0 0.0
    %260 = vmatprep.subr.mxu0 0.0
    %261 = vmatpush1.msra.mxu0 0.0
    %262 = vmatprep.subr.mxu0 0.0
    %263 = vmatpush1.msra.mxu0 0.0
    %264 = vmatprep.subr.mxu0 %v87
    %265 = vmatpush1.msra.mxu0 %v86
    %266 = vmatprep.subr.mxu0 %v79
    %267 = vmatpush1.msra.mxu0 %v78
    %268 = vmatprep.subr.mxu0 0.0
    %269 = vmatpush2.msra.mxu0 0.0
    %270 = vmatprep.subr.mxu0 0.0
    %271 = vmatpush2.msra.mxu0 0.0
    %272 = vmatprep.subr.mxu0 0.0
    %273 = vmatpush2.msra.mxu0 0.0
    %274 = vmatprep.subr.mxu0 0.0
    %275 = vmatpush2.msra.mxu0 0.0
    %276 = vmatprep.subr.mxu0 0.0
    %277 = vmatpush2.msra.mxu0 0.0
    %278 = vmatprep.subr.mxu0 0.0
    %279 = vmatpush2.msra.mxu0 0.0
    %280 = vmatprep.subr.mxu0 0.0
    %281 = vmatpush2.msra.mxu0 0.0
    %282 = vmatprep.subr.mxu0 0.0
    %283 = vmatpush2.msra.mxu0 0.0
    %284 = vmatprep.subr.mxu0 0.0
    %285 = vmatpush2.msra.mxu0 0.0
    %286 = vmatprep.subr.mxu0 0.0
    %287 = vmatpush2.msra.mxu0 0.0
    %288 = vmatprep.subr.mxu0 0.0
    %289 = vmatpush2.msra.mxu0 0.0
    %290 = vmatprep.subr.mxu0 0.0
    %291 = vmatpush2.msra.mxu0 0.0
    %292 = vmatprep.subr.mxu0 0.0
    %293 = vmatpush2.msra.mxu0 0.0
    %294 = vmatprep.subr.mxu0 0.0
    %295 = vmatpush2.msra.mxu0 0.0
    %296 = vmatprep.subr.mxu0 0.0
    %297 = vmatpush2.msra.mxu0 0.0
    %298 = vmatprep.subr.mxu0 0.0
    %299 = vmatpush2.msra.mxu0 0.0
    %300 = vmatprep.mubr.f32.mxu0 0.0
    %301 = vmatmul.mubr.f32.gmra.mxu0 %v92
    %v302 = vpop.f32.mrf.mxu0
    %v303 = vadd.f32 0.0, %v302
    %v304 = vpop.f32.mrf.mxu0
    %v305 = vadd.f32 0.0, %v304
    %306 = vdwg.mxu0
    %307 = vmatprep.subr.mxu0 0.0
    %308 = vmatpush1.msra.mxu0 0.0
    %309 = vmatprep.subr.mxu0 0.0
    %310 = vmatpush1.msra.mxu0 0.0
    %311 = vmatprep.subr.mxu0 0.0
    %312 = vmatpush1.msra.mxu0 0.0
    %313 = vmatprep.subr.mxu0 0.0
    %314 = vmatpush1.msra.mxu0 0.0
    %315 = vmatprep.subr.mxu0 0.0
    %316 = vmatpush1.msra.mxu0 0.0
    %317 = vmatprep.subr.mxu0 0.0
    %318 = vmatpush1.msra.mxu0 0.0
    %319 = vmatprep.subr.mxu0 0.0
    %320 = vmatpush1.msra.mxu0 0.0
    %321 = vmatprep.subr.mxu0 0.0
    %322 = vmatpush1.msra.mxu0 0.0
    %323 = vmatprep.subr.mxu0 0.0
    %324 = vmatpush1.msra.mxu0 0.0
    %325 = vmatprep.subr.mxu0 0.0
    %326 = vmatpush1.msra.mxu0 0.0
    %327 = vmatprep.subr.mxu0 0.0
    %328 = vmatpush1.msra.mxu0 0.0
    %329 = vmatprep.subr.mxu0 0.0
    %330 = vmatpush1.msra.mxu0 0.0
    %331 = vmatprep.subr.mxu0 0.0
    %332 = vmatpush1.msra.mxu0 0.0
    %333 = vmatprep.subr.mxu0 0.0
    %334 = vmatpush1.msra.mxu0 0.0
    %335 = vmatprep.subr.mxu0 %v89
    %336 = vmatpush1.msra.mxu0 %v88
    %337 = vmatprep.subr.mxu0 %v81
    %338 = vmatpush1.msra.mxu0 %v80
    %339 = vmatprep.subr.mxu0 0.0
    %340 = vmatpush2.msra.mxu0 0.0
    %341 = vmatprep.subr.mxu0 0.0
    %342 = vmatpush2.msra.mxu0 0.0
    %343 = vmatprep.subr.mxu0 0.0
    %344 = vmatpush2.msra.mxu0 0.0
    %345 = vmatprep.subr.mxu0 0.0
    %346 = vmatpush2.msra.mxu0 0.0
    %347 = vmatprep.subr.mxu0 0.0
    %348 = vmatpush2.msra.mxu0 0.0
    %349 = vmatprep.subr.mxu0 0.0
    %350 = vmatpush2.msra.mxu0 0.0
    %351 = vmatprep.subr.mxu0 0.0
    %352 = vmatpush2.msra.mxu0 0.0
    %353 = vmatprep.subr.mxu0 0.0
    %354 = vmatpush2.msra.mxu0 0.0
    %355 = vmatprep.subr.mxu0 0.0
    %356 = vmatpush2.msra.mxu0 0.0
    %357 = vmatprep.subr.mxu0 0.0
    %358 = vmatpush2.msra.mxu0 0.0
    %359 = vmatprep.subr.mxu0 0.0
    %360 = vmatpush2.msra.mxu0 0.0
    %361 = vmatprep.subr.mxu0 0.0
    %362 = vmatpush2.msra.mxu0 0.0
    %363 = vmatprep.subr.mxu0 0.0
    %364 = vmatpush2.msra.mxu0 0.0
    %365 = vmatprep.subr.mxu0 0.0
    %366 = vmatpush2.msra.mxu0 0.0
    %367 = vmatprep.subr.mxu0 0.0
    %368 = vmatpush2.msra.mxu0 0.0
    %369 = vmatprep.subr.mxu0 0.0
    %370 = vmatpush2.msra.mxu0 0.0
    %371 = vmatprep.mubr.f32.mxu0 0.0
    %372 = vmatmul.mubr.f32.gmra.mxu0 %v92
    %v373 = vpop.f32.mrf.mxu0
    %v374 = vadd.f32 0.0, %v373
    %v375 = vpop.f32.mrf.mxu0
    %v376 = vadd.f32 0.0, %v375
    %377 = vdwg.mxu0
    %v378 = vld [vmem:[#allocation3] sm:$0xff]
    %v379 = vld [vmem:[#allocation3 + $0x8] sm:$0xff]
    %v380 = vld [vmem:[#allocation3 + $0x10] sm:$0xff]
    %v381 = vld [vmem:[#allocation3 + $0x18] sm:$0xff]
    %v382 = vld [vmem:[#allocation3 + $0x20] sm:$0xff]
    %v383 = vld [vmem:[#allocation3 + $0x28] sm:$0xff]
    %v384 = vld [vmem:[#allocation3 + $0x30] sm:$0xff]
    %v385 = vld [vmem:[#allocation3 + $0x38] sm:$0xff]
    %v386 = vld [vmem:[#allocation3 + $0x40] sm:$0xff]
    %v387 = vld [vmem:[#allocation3 + $0x48] sm:$0xff]
    %v388 = vld [vmem:[#allocation3 + $0x50] sm:$0xff]
    %v389 = vld [vmem:[#allocation3 + $0x58] sm:$0xff]
    %v390 = vld [vmem:[#allocation3 + $0x60] sm:$0xff]
    %v391 = vld [vmem:[#allocation3 + $0x68] sm:$0xff]
    %v392 = vld [vmem:[#allocation3 + $0x70] sm:$0xff]
    %v393 = vld [vmem:[#allocation3 + $0x78] sm:$0xff]
    %394 = vmatprep.subr.mxu0 0.0
    %395 = vmatpush1.msra.mxu0 %v393
    %396 = vmatprep.subr.mxu0 0.0
    %397 = vmatpush1.msra.mxu0 %v392
    %398 = vmatprep.subr.mxu0 0.0
    %399 = vmatpush1.msra.mxu0 %v391
    %400 = vmatprep.subr.mxu0 0.0
    %401 = vmatpush1.msra.mxu0 %v390
    %402 = vmatprep.subr.mxu0 0.0
    %403 = vmatpush1.msra.mxu0 %v389
    %404 = vmatprep.subr.mxu0 0.0
    %405 = vmatpush1.msra.mxu0 %v388
    %406 = vmatprep.subr.mxu0 0.0
    %407 = vmatpush1.msra.mxu0 %v387
    %408 = vmatprep.subr.mxu0 0.0
    %409 = vmatpush1.msra.mxu0 %v386
    %410 = vmatprep.subr.mxu0 0.0
    %411 = vmatpush1.msra.mxu0 %v385
    %412 = vmatprep.subr.mxu0 0.0
    %413 = vmatpush1.msra.mxu0 %v384
    %414 = vmatprep.subr.mxu0 0.0
    %415 = vmatpush1.msra.mxu0 %v383
    %416 = vmatprep.subr.mxu0 0.0
    %417 = vmatpush1.msra.mxu0 %v382
    %418 = vmatprep.subr.mxu0 0.0
    %419 = vmatpush1.msra.mxu0 %v381
    %420 = vmatprep.subr.mxu0 0.0
    %421 = vmatpush1.msra.mxu0 %v380
    %422 = vmatprep.subr.mxu0 0.0
    %423 = vmatpush1.msra.mxu0 %v379
    %424 = vmatprep.subr.mxu0 0.0
    %425 = vmatpush1.msra.mxu0 %v378
    %426 = vmatprep.subr.mxu0 0.0
    %427 = vmatpush2.msra.mxu0 0.0
    %428 = vmatprep.subr.mxu0 0.0
    %429 = vmatpush2.msra.mxu0 0.0
    %430 = vmatprep.subr.mxu0 0.0
    %431 = vmatpush2.msra.mxu0 0.0
    %432 = vmatprep.subr.mxu0 0.0
    %433 = vmatpush2.msra.mxu0 0.0
    %434 = vmatprep.subr.mxu0 0.0
    %435 = vmatpush2.msra.mxu0 0.0
    %436 = vmatprep.subr.mxu0 0.0
    %437 = vmatpush2.msra.mxu0 0.0
    %438 = vmatprep.subr.mxu0 0.0
    %439 = vmatpush2.msra.mxu0 0.0
    %440 = vmatprep.subr.mxu0 0.0
    %441 = vmatpush2.msra.mxu0 0.0
    %442 = vmatprep.subr.mxu0 0.0
    %443 = vmatpush2.msra.mxu0 0.0
    %444 = vmatprep.subr.mxu0 0.0
    %445 = vmatpush2.msra.mxu0 0.0
    %446 = vmatprep.subr.mxu0 0.0
    %447 = vmatpush2.msra.mxu0 0.0
    %448 = vmatprep.subr.mxu0 0.0
    %449 = vmatpush2.msra.mxu0 0.0
    %450 = vmatprep.subr.mxu0 0.0
    %451 = vmatpush2.msra.mxu0 0.0
    %452 = vmatprep.subr.mxu0 0.0
    %453 = vmatpush2.msra.mxu0 0.0
    %454 = vmatprep.subr.mxu0 0.0
    %455 = vmatpush2.msra.mxu0 0.0
    %456 = vmatprep.subr.mxu0 0.0
    %457 = vmatpush2.msra.mxu0 0.0
    %458 = vmatprep.mubr.f32.mxu0 0.0
    %459 = vmatmul.mubr.f32.gmra.mxu0 %v161
    %v460 = vpop.f32.mrf.mxu0
    %v461 = vadd.f32 0.0, %v460
    %v462 = vpop.f32.mrf.mxu0
    %463 = vdwg.mxu0
    %v464 = vmax.f32 %v461, 0.0
    %s465 = scalar_lea.vmem [#allocation3], 128
    %v466 = vld [vmem:[%s465] sm:$0xff]
    %v467 = vld [vmem:[%s465 + $0x8] sm:$0xff]
    %v468 = vld [vmem:[%s465 + $0x10] sm:$0xff]
    %v469 = vld [vmem:[%s465 + $0x18] sm:$0xff]
    %v470 = vld [vmem:[%s465 + $0x20] sm:$0xff]
    %v471 = vld [vmem:[%s465 + $0x28] sm:$0xff]
    %v472 = vld [vmem:[%s465 + $0x30] sm:$0xff]
    %v473 = vld [vmem:[%s465 + $0x38] sm:$0xff]
    %v474 = vld [vmem:[%s465 + $0x40] sm:$0xff]
    %v475 = vld [vmem:[%s465 + $0x48] sm:$0xff]
    %v476 = vld [vmem:[%s465 + $0x50] sm:$0xff]
    %v477 = vld [vmem:[%s465 + $0x58] sm:$0xff]
    %v478 = vld [vmem:[%s465 + $0x60] sm:$0xff]
    %v479 = vld [vmem:[%s465 + $0x68] sm:$0xff]
    %v480 = vld [vmem:[%s465 + $0x70] sm:$0xff]
    %v481 = vld [vmem:[%s465 + $0x78] sm:$0xff]
    %482 = vmatprep.subr.mxu0 0.0
    %483 = vmatpush1.msra.mxu0 %v481
    %484 = vmatprep.subr.mxu0 0.0
    %485 = vmatpush1.msra.mxu0 %v480
    %486 = vmatprep.subr.mxu0 0.0
    %487 = vmatpush1.msra.mxu0 %v479
    %488 = vmatprep.subr.mxu0 0.0
    %489 = vmatpush1.msra.mxu0 %v478
    %490 = vmatprep.subr.mxu0 0.0
    %491 = vmatpush1.msra.mxu0 %v477
    %492 = vmatprep.subr.mxu0 0.0
    %493 = vmatpush1.msra.mxu0 %v476
    %494 = vmatprep.subr.mxu0 0.0
    %495 = vmatpush1.msra.mxu0 %v475
    %496 = vmatprep.subr.mxu0 0.0
    %497 = vmatpush1.msra.mxu0 %v474
    %498 = vmatprep.subr.mxu0 0.0
    %499 = vmatpush1.msra.mxu0 %v473
    %500 = vmatprep.subr.mxu0 0.0
    %501 = vmatpush1.msra.mxu0 %v472
    %502 = vmatprep.subr.mxu0 0.0
    %503 = vmatpush1.msra.mxu0 %v471
    %504 = vmatprep.subr.mxu0 0.0
    %505 = vmatpush1.msra.mxu0 %v470
    %506 = vmatprep.subr.mxu0 0.0
    %507 = vmatpush1.msra.mxu0 %v469
    %508 = vmatprep.subr.mxu0 0.0
    %509 = vmatpush1.msra.mxu0 %v468
    %510 = vmatprep.subr.mxu0 0.0
    %511 = vmatpush1.msra.mxu0 %v467
    %512 = vmatprep.subr.mxu0 0.0
    %513 = vmatpush1.msra.mxu0 %v466
    %514 = vmatprep.subr.mxu0 0.0
    %515 = vmatpush2.msra.mxu0 0.0
    %516 = vmatprep.subr.mxu0 0.0
    %517 = vmatpush2.msra.mxu0 0.0
    %518 = vmatprep.subr.mxu0 0.0
    %519 = vmatpush2.msra.mxu0 0.0
    %520 = vmatprep.subr.mxu0 0.0
    %521 = vmatpush2.msra.mxu0 0.0
    %522 = vmatprep.subr.mxu0 0.0
    %523 = vmatpush2.msra.mxu0 0.0
    %524 = vmatprep.subr.mxu0 0.0
    %525 = vmatpush2.msra.mxu0 0.0
    %526 = vmatprep.subr.mxu0 0.0
    %527 = vmatpush2.msra.mxu0 0.0
    %528 = vmatprep.subr.mxu0 0.0
    %529 = vmatpush2.msra.mxu0 0.0
    %530 = vmatprep.subr.mxu0 0.0
    %531 = vmatpush2.msra.mxu0 0.0
    %532 = vmatprep.subr.mxu0 0.0
    %533 = vmatpush2.msra.mxu0 0.0
    %534 = vmatprep.subr.mxu0 0.0
    %535 = vmatpush2.msra.mxu0 0.0
    %536 = vmatprep.subr.mxu0 0.0
    %537 = vmatpush2.msra.mxu0 0.0
    %538 = vmatprep.subr.mxu0 0.0
    %539 = vmatpush2.msra.mxu0 0.0
    %540 = vmatprep.subr.mxu0 0.0
    %541 = vmatpush2.msra.mxu0 0.0
    %542 = vmatprep.subr.mxu0 0.0
    %543 = vmatpush2.msra.mxu0 0.0
    %544 = vmatprep.subr.mxu0 0.0
    %545 = vmatpush2.msra.mxu0 0.0
    %546 = vmatprep.mubr.f32.mxu0 0.0
    %547 = vmatmul.mubr.f32.gmra.mxu0 %v163
    %v548 = vpop.f32.mrf.mxu0
    %v549 = vadd.f32 0.0, %v548
    %v550 = vpop.f32.mrf.mxu0
    %551 = vdwg.mxu0
    %v552 = vmax.f32 %v549, 0.0
    %s553 = scalar_lea.vmem [#allocation3], 256
    %v554 = vld [vmem:[%s553] sm:$0xff]
    %v555 = vld [vmem:[%s553 + $0x8] sm:$0xff]
    %v556 = vld [vmem:[%s553 + $0x10] sm:$0xff]
    %v557 = vld [vmem:[%s553 + $0x18] sm:$0xff]
    %v558 = vld [vmem:[%s553 + $0x20] sm:$0xff]
    %v559 = vld [vmem:[%s553 + $0x28] sm:$0xff]
    %v560 = vld [vmem:[%s553 + $0x30] sm:$0xff]
    %v561 = vld [vmem:[%s553 + $0x38] sm:$0xff]
    %v562 = vld [vmem:[%s553 + $0x40] sm:$0xff]
    %v563 = vld [vmem:[%s553 + $0x48] sm:$0xff]
    %v564 = vld [vmem:[%s553 + $0x50] sm:$0xff]
    %v565 = vld [vmem:[%s553 + $0x58] sm:$0xff]
    %v566 = vld [vmem:[%s553 + $0x60] sm:$0xff]
    %v567 = vld [vmem:[%s553 + $0x68] sm:$0xff]
    %v568 = vld [vmem:[%s553 + $0x70] sm:$0xff]
    %v569 = vld [vmem:[%s553 + $0x78] sm:$0xff]
    %570 = vmatprep.subr.mxu0 0.0
    %571 = vmatpush1.msra.mxu0 %v569
    %572 = vmatprep.subr.mxu0 0.0
    %573 = vmatpush1.msra.mxu0 %v568
    %574 = vmatprep.subr.mxu0 0.0
    %575 = vmatpush1.msra.mxu0 %v567
    %576 = vmatprep.subr.mxu0 0.0
    %577 = vmatpush1.msra.mxu0 %v566
    %578 = vmatprep.subr.mxu0 0.0
    %579 = vmatpush1.msra.mxu0 %v565
    %580 = vmatprep.subr.mxu0 0.0
    %581 = vmatpush1.msra.mxu0 %v564
    %582 = vmatprep.subr.mxu0 0.0
    %583 = vmatpush1.msra.mxu0 %v563
    %584 = vmatprep.subr.mxu0 0.0
    %585 = vmatpush1.msra.mxu0 %v562
    %586 = vmatprep.subr.mxu0 0.0
    %587 = vmatpush1.msra.mxu0 %v561
    %588 = vmatprep.subr.mxu0 0.0
    %589 = vmatpush1.msra.mxu0 %v560
    %590 = vmatprep.subr.mxu0 0.0
    %591 = vmatpush1.msra.mxu0 %v559
    %592 = vmatprep.subr.mxu0 0.0
    %593 = vmatpush1.msra.mxu0 %v558
    %594 = vmatprep.subr.mxu0 0.0
    %595 = vmatpush1.msra.mxu0 %v557
    %596 = vmatprep.subr.mxu0 0.0
    %597 = vmatpush1.msra.mxu0 %v556
    %598 = vmatprep.subr.mxu0 0.0
    %599 = vmatpush1.msra.mxu0 %v555
    %600 = vmatprep.subr.mxu0 0.0
    %601 = vmatpush1.msra.mxu0 %v554
    %602 = vmatprep.subr.mxu0 0.0
    %603 = vmatpush2.msra.mxu0 0.0
    %604 = vmatprep.subr.mxu0 0.0
    %605 = vmatpush2.msra.mxu0 0.0
    %606 = vmatprep.subr.mxu0 0.0
    %607 = vmatpush2.msra.mxu0 0.0
    %608 = vmatprep.subr.mxu0 0.0
    %609 = vmatpush2.msra.mxu0 0.0
    %610 = vmatprep.subr.mxu0 0.0
    %611 = vmatpush2.msra.mxu0 0.0
    %612 = vmatprep.subr.mxu0 0.0
    %613 = vmatpush2.msra.mxu0 0.0
    %614 = vmatprep.subr.mxu0 0.0
    %615 = vmatpush2.msra.mxu0 0.0
    %616 = vmatprep.subr.mxu0 0.0
    %617 = vmatpush2.msra.mxu0 0.0
    %618 = vmatprep.subr.mxu0 0.0
    %619 = vmatpush2.msra.mxu0 0.0
    %620 = vmatprep.subr.mxu0 0.0
    %621 = vmatpush2.msra.mxu0 0.0
    %622 = vmatprep.subr.mxu0 0.0
    %623 = vmatpush2.msra.mxu0 0.0
    %624 = vmatprep.subr.mxu0 0.0
    %625 = vmatpush2.msra.mxu0 0.0
    %626 = vmatprep.subr.mxu0 0.0
    %627 = vmatpush2.msra.mxu0 0.0
    %628 = vmatprep.subr.mxu0 0.0
    %629 = vmatpush2.msra.mxu0 0.0
    %630 = vmatprep.subr.mxu0 0.0
    %631 = vmatpush2.msra.mxu0 0.0
    %632 = vmatprep.subr.mxu0 0.0
    %633 = vmatpush2.msra.mxu0 0.0
    %634 = vmatprep.mubr.f32.mxu0 0.0
    %635 = vmatmul.mubr.f32.gmra.mxu0 %v232
    %v636 = vpop.f32.mrf.mxu0
    %v637 = vadd.f32 0.0, %v636
    %v638 = vpop.f32.mrf.mxu0
    %639 = vdwg.mxu0
    %v640 = vmax.f32 %v637, 0.0
    %s641 = scalar_lea.vmem [#allocation3], 384
    %v642 = vld [vmem:[%s641] sm:$0xff]
    %v643 = vld [vmem:[%s641 + $0x8] sm:$0xff]
    %v644 = vld [vmem:[%s641 + $0x10] sm:$0xff]
    %v645 = vld [vmem:[%s641 + $0x18] sm:$0xff]
    %v646 = vld [vmem:[%s641 + $0x20] sm:$0xff]
    %v647 = vld [vmem:[%s641 + $0x28] sm:$0xff]
    %v648 = vld [vmem:[%s641 + $0x30] sm:$0xff]
    %v649 = vld [vmem:[%s641 + $0x38] sm:$0xff]
    %v650 = vld [vmem:[%s641 + $0x40] sm:$0xff]
    %v651 = vld [vmem:[%s641 + $0x48] sm:$0xff]
    %v652 = vld [vmem:[%s641 + $0x50] sm:$0xff]
    %v653 = vld [vmem:[%s641 + $0x58] sm:$0xff]
    %v654 = vld [vmem:[%s641 + $0x60] sm:$0xff]
    %v655 = vld [vmem:[%s641 + $0x68] sm:$0xff]
    %v656 = vld [vmem:[%s641 + $0x70] sm:$0xff]
    %v657 = vld [vmem:[%s641 + $0x78] sm:$0xff]
    %658 = vmatprep.subr.mxu0 0.0
    %659 = vmatpush1.msra.mxu0 %v657
    %660 = vmatprep.subr.mxu0 0.0
    %661 = vmatpush1.msra.mxu0 %v656
    %662 = vmatprep.subr.mxu0 0.0
    %663 = vmatpush1.msra.mxu0 %v655
    %664 = vmatprep.subr.mxu0 0.0
    %665 = vmatpush1.msra.mxu0 %v654
    %666 = vmatprep.subr.mxu0 0.0
    %667 = vmatpush1.msra.mxu0 %v653
    %668 = vmatprep.subr.mxu0 0.0
    %669 = vmatpush1.msra.mxu0 %v652
    %670 = vmatprep.subr.mxu0 0.0
    %671 = vmatpush1.msra.mxu0 %v651
    %672 = vmatprep.subr.mxu0 0.0
    %673 = vmatpush1.msra.mxu0 %v650
    %674 = vmatprep.subr.mxu0 0.0
    %675 = vmatpush1.msra.mxu0 %v649
    %676 = vmatprep.subr.mxu0 0.0
    %677 = vmatpush1.msra.mxu0 %v648
    %678 = vmatprep.subr.mxu0 0.0
    %679 = vmatpush1.msra.mxu0 %v647
    %680 = vmatprep.subr.mxu0 0.0
    %681 = vmatpush1.msra.mxu0 %v646
    %682 = vmatprep.subr.mxu0 0.0
    %683 = vmatpush1.msra.mxu0 %v645
    %684 = vmatprep.subr.mxu0 0.0
    %685 = vmatpush1.msra.mxu0 %v644
    %686 = vmatprep.subr.mxu0 0.0
    %687 = vmatpush1.msra.mxu0 %v643
    %688 = vmatprep.subr.mxu0 0.0
    %689 = vmatpush1.msra.mxu0 %v642
    %690 = vmatprep.subr.mxu0 0.0
    %691 = vmatpush2.msra.mxu0 0.0
    %692 = vmatprep.subr.mxu0 0.0
    %693 = vmatpush2.msra.mxu0 0.0
    %694 = vmatprep.subr.mxu0 0.0
    %695 = vmatpush2.msra.mxu0 0.0
    %696 = vmatprep.subr.mxu0 0.0
    %697 = vmatpush2.msra.mxu0 0.0
    %698 = vmatprep.subr.mxu0 0.0
    %699 = vmatpush2.msra.mxu0 0.0
    %700 = vmatprep.subr.mxu0 0.0
    %701 = vmatpush2.msra.mxu0 0.0
    %702 = vmatprep.subr.mxu0 0.0
    %703 = vmatpush2.msra.mxu0 0.0
    %704 = vmatprep.subr.mxu0 0.0
    %705 = vmatpush2.msra.mxu0 0.0
    %706 = vmatprep.subr.mxu0 0.0
    %707 = vmatpush2.msra.mxu0 0.0
    %708 = vmatprep.subr.mxu0 0.0
    %709 = vmatpush2.msra.mxu0 0.0
    %710 = vmatprep.subr.mxu0 0.0
    %711 = vmatpush2.msra.mxu0 0.0
    %712 = vmatprep.subr.mxu0 0.0
    %713 = vmatpush2.msra.mxu0 0.0
    %714 = vmatprep.subr.mxu0 0.0
    %715 = vmatpush2.msra.mxu0 0.0
    %716 = vmatprep.subr.mxu0 0.0
    %717 = vmatpush2.msra.mxu0 0.0
    %718 = vmatprep.subr.mxu0 0.0
    %719 = vmatpush2.msra.mxu0 0.0
    %720 = vmatprep.subr.mxu0 0.0
    %721 = vmatpush2.msra.mxu0 0.0
    %722 = vmatprep.mubr.f32.mxu0 0.0
    %723 = vmatmul.mubr.f32.gmra.mxu0 %v234
    %v724 = vpop.f32.mrf.mxu0
    %v725 = vadd.f32 0.0, %v724
    %v726 = vpop.f32.mrf.mxu0
    %727 = vdwg.mxu0
    %v728 = vmax.f32 %v725, 0.0
    %s729 = scalar_lea.vmem [#allocation3], 512
    %v730 = vld [vmem:[%s729] sm:$0xff]
    %v731 = vld [vmem:[%s729 + $0x8] sm:$0xff]
    %v732 = vld [vmem:[%s729 + $0x10] sm:$0xff]
    %v733 = vld [vmem:[%s729 + $0x18] sm:$0xff]
    %v734 = vld [vmem:[%s729 + $0x20] sm:$0xff]
    %v735 = vld [vmem:[%s729 + $0x28] sm:$0xff]
    %v736 = vld [vmem:[%s729 + $0x30] sm:$0xff]
    %v737 = vld [vmem:[%s729 + $0x38] sm:$0xff]
    %v738 = vld [vmem:[%s729 + $0x40] sm:$0xff]
    %v739 = vld [vmem:[%s729 + $0x48] sm:$0xff]
    %v740 = vld [vmem:[%s729 + $0x50] sm:$0xff]
    %v741 = vld [vmem:[%s729 + $0x58] sm:$0xff]
    %v742 = vld [vmem:[%s729 + $0x60] sm:$0xff]
    %v743 = vld [vmem:[%s729 + $0x68] sm:$0xff]
    %v744 = vld [vmem:[%s729 + $0x70] sm:$0xff]
    %v745 = vld [vmem:[%s729 + $0x78] sm:$0xff]
    %746 = vmatprep.subr.mxu0 0.0
    %747 = vmatpush1.msra.mxu0 %v745
    %748 = vmatprep.subr.mxu0 0.0
    %749 = vmatpush1.msra.mxu0 %v744
    %750 = vmatprep.subr.mxu0 0.0
    %751 = vmatpush1.msra.mxu0 %v743
    %752 = vmatprep.subr.mxu0 0.0
    %753 = vmatpush1.msra.mxu0 %v742
    %754 = vmatprep.subr.mxu0 0.0
    %755 = vmatpush1.msra.mxu0 %v741
    %756 = vmatprep.subr.mxu0 0.0
    %757 = vmatpush1.msra.mxu0 %v740
    %758 = vmatprep.subr.mxu0 0.0
    %759 = vmatpush1.msra.mxu0 %v739
    %760 = vmatprep.subr.mxu0 0.0
    %761 = vmatpush1.msra.mxu0 %v738
    %762 = vmatprep.subr.mxu0 0.0
    %763 = vmatpush1.msra.mxu0 %v737
    %764 = vmatprep.subr.mxu0 0.0
    %765 = vmatpush1.msra.mxu0 %v736
    %766 = vmatprep.subr.mxu0 0.0
    %767 = vmatpush1.msra.mxu0 %v735
    %768 = vmatprep.subr.mxu0 0.0
    %769 = vmatpush1.msra.mxu0 %v734
    %770 = vmatprep.subr.mxu0 0.0
    %771 = vmatpush1.msra.mxu0 %v733
    %772 = vmatprep.subr.mxu0 0.0
    %773 = vmatpush1.msra.mxu0 %v732
    %774 = vmatprep.subr.mxu0 0.0
    %775 = vmatpush1.msra.mxu0 %v731
    %776 = vmatprep.subr.mxu0 0.0
    %777 = vmatpush1.msra.mxu0 %v730
    %778 = vmatprep.subr.mxu0 0.0
    %779 = vmatpush2.msra.mxu0 0.0
    %780 = vmatprep.subr.mxu0 0.0
    %781 = vmatpush2.msra.mxu0 0.0
    %782 = vmatprep.subr.mxu0 0.0
    %783 = vmatpush2.msra.mxu0 0.0
    %784 = vmatprep.subr.mxu0 0.0
    %785 = vmatpush2.msra.mxu0 0.0
    %786 = vmatprep.subr.mxu0 0.0
    %787 = vmatpush2.msra.mxu0 0.0
    %788 = vmatprep.subr.mxu0 0.0
    %789 = vmatpush2.msra.mxu0 0.0
    %790 = vmatprep.subr.mxu0 0.0
    %791 = vmatpush2.msra.mxu0 0.0
    %792 = vmatprep.subr.mxu0 0.0
    %793 = vmatpush2.msra.mxu0 0.0
    %794 = vmatprep.subr.mxu0 0.0
    %795 = vmatpush2.msra.mxu0 0.0
    %796 = vmatprep.subr.mxu0 0.0
    %797 = vmatpush2.msra.mxu0 0.0
    %798 = vmatprep.subr.mxu0 0.0
    %799 = vmatpush2.msra.mxu0 0.0
    %800 = vmatprep.subr.mxu0 0.0
    %801 = vmatpush2.msra.mxu0 0.0
    %802 = vmatprep.subr.mxu0 0.0
    %803 = vmatpush2.msra.mxu0 0.0
    %804 = vmatprep.subr.mxu0 0.0
    %805 = vmatpush2.msra.mxu0 0.0
    %806 = vmatprep.subr.mxu0 0.0
    %807 = vmatpush2.msra.mxu0 0.0
    %808 = vmatprep.subr.mxu0 0.0
    %809 = vmatpush2.msra.mxu0 0.0
    %810 = vmatprep.mubr.f32.mxu0 0.0
    %811 = vmatmul.mubr.f32.gmra.mxu0 %v303
    %v812 = vpop.f32.mrf.mxu0
    %v813 = vadd.f32 0.0, %v812
    %v814 = vpop.f32.mrf.mxu0
    %815 = vdwg.mxu0
    %v816 = vmax.f32 %v813, 0.0
    %s817 = scalar_lea.vmem [#allocation3], 640
    %v818 = vld [vmem:[%s817] sm:$0xff]
    %v819 = vld [vmem:[%s817 + $0x8] sm:$0xff]
    %v820 = vld [vmem:[%s817 + $0x10] sm:$0xff]
    %v821 = vld [vmem:[%s817 + $0x18] sm:$0xff]
    %v822 = vld [vmem:[%s817 + $0x20] sm:$0xff]
    %v823 = vld [vmem:[%s817 + $0x28] sm:$0xff]
    %v824 = vld [vmem:[%s817 + $0x30] sm:$0xff]
    %v825 = vld [vmem:[%s817 + $0x38] sm:$0xff]
    %v826 = vld [vmem:[%s817 + $0x40] sm:$0xff]
    %v827 = vld [vmem:[%s817 + $0x48] sm:$0xff]
    %v828 = vld [vmem:[%s817 + $0x50] sm:$0xff]
    %v829 = vld [vmem:[%s817 + $0x58] sm:$0xff]
    %v830 = vld [vmem:[%s817 + $0x60] sm:$0xff]
    %v831 = vld [vmem:[%s817 + $0x68] sm:$0xff]
    %v832 = vld [vmem:[%s817 + $0x70] sm:$0xff]
    %v833 = vld [vmem:[%s817 + $0x78] sm:$0xff]
    %834 = vmatprep.subr.mxu0 0.0
    %835 = vmatpush1.msra.mxu0 %v833
    %836 = vmatprep.subr.mxu0 0.0
    %837 = vmatpush1.msra.mxu0 %v832
    %838 = vmatprep.subr.mxu0 0.0
    %839 = vmatpush1.msra.mxu0 %v831
    %840 = vmatprep.subr.mxu0 0.0
    %841 = vmatpush1.msra.mxu0 %v830
    %842 = vmatprep.subr.mxu0 0.0
    %843 = vmatpush1.msra.mxu0 %v829
    %844 = vmatprep.subr.mxu0 0.0
    %845 = vmatpush1.msra.mxu0 %v828
    %846 = vmatprep.subr.mxu0 0.0
    %847 = vmatpush1.msra.mxu0 %v827
    %848 = vmatprep.subr.mxu0 0.0
    %849 = vmatpush1.msra.mxu0 %v826
    %850 = vmatprep.subr.mxu0 0.0
    %851 = vmatpush1.msra.mxu0 %v825
    %852 = vmatprep.subr.mxu0 0.0
    %853 = vmatpush1.msra.mxu0 %v824
    %854 = vmatprep.subr.mxu0 0.0
    %855 = vmatpush1.msra.mxu0 %v823
    %856 = vmatprep.subr.mxu0 0.0
    %857 = vmatpush1.msra.mxu0 %v822
    %858 = vmatprep.subr.mxu0 0.0
    %859 = vmatpush1.msra.mxu0 %v821
    %860 = vmatprep.subr.mxu0 0.0
    %861 = vmatpush1.msra.mxu0 %v820
    %862 = vmatprep.subr.mxu0 0.0
    %863 = vmatpush1.msra.mxu0 %v819
    %864 = vmatprep.subr.mxu0 0.0
    %865 = vmatpush1.msra.mxu0 %v818
    %866 = vmatprep.subr.mxu0 0.0
    %867 = vmatpush2.msra.mxu0 0.0
    %868 = vmatprep.subr.mxu0 0.0
    %869 = vmatpush2.msra.mxu0 0.0
    %870 = vmatprep.subr.mxu0 0.0
    %871 = vmatpush2.msra.mxu0 0.0
    %872 = vmatprep.subr.mxu0 0.0
    %873 = vmatpush2.msra.mxu0 0.0
    %874 = vmatprep.subr.mxu0 0.0
    %875 = vmatpush2.msra.mxu0 0.0
    %876 = vmatprep.subr.mxu0 0.0
    %877 = vmatpush2.msra.mxu0 0.0
    %878 = vmatprep.subr.mxu0 0.0
    %879 = vmatpush2.msra.mxu0 0.0
    %880 = vmatprep.subr.mxu0 0.0
    %881 = vmatpush2.msra.mxu0 0.0
    %882 = vmatprep.subr.mxu0 0.0
    %883 = vmatpush2.msra.mxu0 0.0
    %884 = vmatprep.subr.mxu0 0.0
    %885 = vmatpush2.msra.mxu0 0.0
    %886 = vmatprep.subr.mxu0 0.0
    %887 = vmatpush2.msra.mxu0 0.0
    %888 = vmatprep.subr.mxu0 0.0
    %889 = vmatpush2.msra.mxu0 0.0
    %890 = vmatprep.subr.mxu0 0.0
    %891 = vmatpush2.msra.mxu0 0.0
    %892 = vmatprep.subr.mxu0 0.0
    %893 = vmatpush2.msra.mxu0 0.0
    %894 = vmatprep.subr.mxu0 0.0
    %895 = vmatpush2.msra.mxu0 0.0
    %896 = vmatprep.subr.mxu0 0.0
    %897 = vmatpush2.msra.mxu0 0.0
    %898 = vmatprep.mubr.f32.mxu0 0.0
    %899 = vmatmul.mubr.f32.gmra.mxu0 %v305
    %v900 = vpop.f32.mrf.mxu0
    %v901 = vadd.f32 0.0, %v900
    %v902 = vpop.f32.mrf.mxu0
    %903 = vdwg.mxu0
    %v904 = vmax.f32 %v901, 0.0
    %s905 = scalar_lea.vmem [#allocation3], 768
    %v906 = vld [vmem:[%s905] sm:$0xff]
    %v907 = vld [vmem:[%s905 + $0x8] sm:$0xff]
    %v908 = vld [vmem:[%s905 + $0x10] sm:$0xff]
    %v909 = vld [vmem:[%s905 + $0x18] sm:$0xff]
    %v910 = vld [vmem:[%s905 + $0x20] sm:$0xff]
    %v911 = vld [vmem:[%s905 + $0x28] sm:$0xff]
    %v912 = vld [vmem:[%s905 + $0x30] sm:$0xff]
    %v913 = vld [vmem:[%s905 + $0x38] sm:$0xff]
    %v914 = vld [vmem:[%s905 + $0x40] sm:$0xff]
    %v915 = vld [vmem:[%s905 + $0x48] sm:$0xff]
    %v916 = vld [vmem:[%s905 + $0x50] sm:$0xff]
    %v917 = vld [vmem:[%s905 + $0x58] sm:$0xff]
    %v918 = vld [vmem:[%s905 + $0x60] sm:$0xff]
    %v919 = vld [vmem:[%s905 + $0x68] sm:$0xff]
    %v920 = vld [vmem:[%s905 + $0x70] sm:$0xff]
    %v921 = vld [vmem:[%s905 + $0x78] sm:$0xff]
    %922 = vmatprep.subr.mxu0 0.0
    %923 = vmatpush1.msra.mxu0 %v921
    %924 = vmatprep.subr.mxu0 0.0
    %925 = vmatpush1.msra.mxu0 %v920
    %926 = vmatprep.subr.mxu0 0.0
    %927 = vmatpush1.msra.mxu0 %v919
    %928 = vmatprep.subr.mxu0 0.0
    %929 = vmatpush1.msra.mxu0 %v918
    %930 = vmatprep.subr.mxu0 0.0
    %931 = vmatpush1.msra.mxu0 %v917
    %932 = vmatprep.subr.mxu0 0.0
    %933 = vmatpush1.msra.mxu0 %v916
    %934 = vmatprep.subr.mxu0 0.0
    %935 = vmatpush1.msra.mxu0 %v915
    %936 = vmatprep.subr.mxu0 0.0
    %937 = vmatpush1.msra.mxu0 %v914
    %938 = vmatprep.subr.mxu0 0.0
    %939 = vmatpush1.msra.mxu0 %v913
    %940 = vmatprep.subr.mxu0 0.0
    %941 = vmatpush1.msra.mxu0 %v912
    %942 = vmatprep.subr.mxu0 0.0
    %943 = vmatpush1.msra.mxu0 %v911
    %944 = vmatprep.subr.mxu0 0.0
    %945 = vmatpush1.msra.mxu0 %v910
    %946 = vmatprep.subr.mxu0 0.0
    %947 = vmatpush1.msra.mxu0 %v909
    %948 = vmatprep.subr.mxu0 0.0
    %949 = vmatpush1.msra.mxu0 %v908
    %950 = vmatprep.subr.mxu0 0.0
    %951 = vmatpush1.msra.mxu0 %v907
    %952 = vmatprep.subr.mxu0 0.0
    %953 = vmatpush1.msra.mxu0 %v906
    %954 = vmatprep.subr.mxu0 0.0
    %955 = vmatpush2.msra.mxu0 0.0
    %956 = vmatprep.subr.mxu0 0.0
    %957 = vmatpush2.msra.mxu0 0.0
    %958 = vmatprep.subr.mxu0 0.0
    %959 = vmatpush2.msra.mxu0 0.0
    %960 = vmatprep.subr.mxu0 0.0
    %961 = vmatpush2.msra.mxu0 0.0
    %962 = vmatprep.subr.mxu0 0.0
    %963 = vmatpush2.msra.mxu0 0.0
    %964 = vmatprep.subr.mxu0 0.0
    %965 = vmatpush2.msra.mxu0 0.0
    %966 = vmatprep.subr.mxu0 0.0
    %967 = vmatpush2.msra.mxu0 0.0
    %968 = vmatprep.subr.mxu0 0.0
    %969 = vmatpush2.msra.mxu0 0.0
    %970 = vmatprep.subr.mxu0 0.0
    %971 = vmatpush2.msra.mxu0 0.0
    %972 = vmatprep.subr.mxu0 0.0
    %973 = vmatpush2.msra.mxu0 0.0
    %974 = vmatprep.subr.mxu0 0.0
    %975 = vmatpush2.msra.mxu0 0.0
    %976 = vmatprep.subr.mxu0 0.0
    %977 = vmatpush2.msra.mxu0 0.0
    %978 = vmatprep.subr.mxu0 0.0
    %979 = vmatpush2.msra.mxu0 0.0
    %980 = vmatprep.subr.mxu0 0.0
    %981 = vmatpush2.msra.mxu0 0.0
    %982 = vmatprep.subr.mxu0 0.0
    %983 = vmatpush2.msra.mxu0 0.0
    %984 = vmatprep.subr.mxu0 0.0
    %985 = vmatpush2.msra.mxu0 0.0
    %986 = vmatprep.mubr.f32.mxu0 0.0
    %987 = vmatmul.mubr.f32.gmra.mxu0 %v374
    %v988 = vpop.f32.mrf.mxu0
    %v989 = vadd.f32 0.0, %v988
    %v990 = vpop.f32.mrf.mxu0
    %991 = vdwg.mxu0
    %v992 = vmax.f32 %v989, 0.0
    %s993 = scalar_lea.vmem [#allocation3], 896
    %v994 = vld [vmem:[%s993] sm:$0xff]
    %v995 = vld [vmem:[%s993 + $0x8] sm:$0xff]
    %v996 = vld [vmem:[%s993 + $0x10] sm:$0xff]
    %v997 = vld [vmem:[%s993 + $0x18] sm:$0xff]
    %v998 = vld [vmem:[%s993 + $0x20] sm:$0xff]
    %v999 = vld [vmem:[%s993 + $0x28] sm:$0xff]
    %v1000 = vld [vmem:[%s993 + $0x30] sm:$0xff]
    %v1001 = vld [vmem:[%s993 + $0x38] sm:$0xff]
    %v1002 = vld [vmem:[%s993 + $0x40] sm:$0xff]
    %v1003 = vld [vmem:[%s993 + $0x48] sm:$0xff]
    %v1004 = vld [vmem:[%s993 + $0x50] sm:$0xff]
    %v1005 = vld [vmem:[%s993 + $0x58] sm:$0xff]
    %v1006 = vld [vmem:[%s993 + $0x60] sm:$0xff]
    %v1007 = vld [vmem:[%s993 + $0x68] sm:$0xff]
    %v1008 = vld [vmem:[%s993 + $0x70] sm:$0xff]
    %v1009 = vld [vmem:[%s993 + $0x78] sm:$0xff]
    %1010 = vmatprep.subr.mxu0 0.0
    %1011 = vmatpush1.msra.mxu0 %v1009
    %1012 = vmatprep.subr.mxu0 0.0
    %1013 = vmatpush1.msra.mxu0 %v1008
    %1014 = vmatprep.subr.mxu0 0.0
    %1015 = vmatpush1.msra.mxu0 %v1007
    %1016 = vmatprep.subr.mxu0 0.0
    %1017 = vmatpush1.msra.mxu0 %v1006
    %1018 = vmatprep.subr.mxu0 0.0
    %1019 = vmatpush1.msra.mxu0 %v1005
    %1020 = vmatprep.subr.mxu0 0.0
    %1021 = vmatpush1.msra.mxu0 %v1004
    %1022 = vmatprep.subr.mxu0 0.0
    %1023 = vmatpush1.msra.mxu0 %v1003
    %1024 = vmatprep.subr.mxu0 0.0
    %1025 = vmatpush1.msra.mxu0 %v1002
    %1026 = vmatprep.subr.mxu0 0.0
    %1027 = vmatpush1.msra.mxu0 %v1001
    %1028 = vmatprep.subr.mxu0 0.0
    %1029 = vmatpush1.msra.mxu0 %v1000
    %1030 = vmatprep.subr.mxu0 0.0
    %1031 = vmatpush1.msra.mxu0 %v999
    %1032 = vmatprep.subr.mxu0 0.0
    %1033 = vmatpush1.msra.mxu0 %v998
    %1034 = vmatprep.subr.mxu0 0.0
    %1035 = vmatpush1.msra.mxu0 %v997
    %1036 = vmatprep.subr.mxu0 0.0
    %1037 = vmatpush1.msra.mxu0 %v996
    %1038 = vmatprep.subr.mxu0 0.0
    %1039 = vmatpush1.msra.mxu0 %v995
    %1040 = vmatprep.subr.mxu0 0.0
    %1041 = vmatpush1.msra.mxu0 %v994
    %1042 = vmatprep.subr.mxu0 0.0
    %1043 = vmatpush2.msra.mxu0 0.0
    %1044 = vmatprep.subr.mxu0 0.0
    %1045 = vmatpush2.msra.mxu0 0.0
    %1046 = vmatprep.subr.mxu0 0.0
    %1047 = vmatpush2.msra.mxu0 0.0
    %1048 = vmatprep.subr.mxu0 0.0
    %1049 = vmatpush2.msra.mxu0 0.0
    %1050 = vmatprep.subr.mxu0 0.0
    %1051 = vmatpush2.msra.mxu0 0.0
    %1052 = vmatprep.subr.mxu0 0.0
    %1053 = vmatpush2.msra.mxu0 0.0
    %1054 = vmatprep.subr.mxu0 0.0
    %1055 = vmatpush2.msra.mxu0 0.0
    %1056 = vmatprep.subr.mxu0 0.0
    %1057 = vmatpush2.msra.mxu0 0.0
    %1058 = vmatprep.subr.mxu0 0.0
    %1059 = vmatpush2.msra.mxu0 0.0
    %1060 = vmatprep.subr.mxu0 0.0
    %1061 = vmatpush2.msra.mxu0 0.0
    %1062 = vmatprep.subr.mxu0 0.0
    %1063 = vmatpush2.msra.mxu0 0.0
    %1064 = vmatprep.subr.mxu0 0.0
    %1065 = vmatpush2.msra.mxu0 0.0
    %1066 = vmatprep.subr.mxu0 0.0
    %1067 = vmatpush2.msra.mxu0 0.0
    %1068 = vmatprep.subr.mxu0 0.0
    %1069 = vmatpush2.msra.mxu0 0.0
    %1070 = vmatprep.subr.mxu0 0.0
    %1071 = vmatpush2.msra.mxu0 0.0
    %1072 = vmatprep.subr.mxu0 0.0
    %1073 = vmatpush2.msra.mxu0 0.0
    %1074 = vmatprep.mubr.f32.mxu0 0.0
    %1075 = vmatmul.mubr.f32.gmra.mxu0 %v376
    %v1076 = vpop.f32.mrf.mxu0
    %v1077 = vadd.f32 0.0, %v1076
    %v1078 = vpop.f32.mrf.mxu0
    %1079 = vdwg.mxu0
    %v1080 = vmax.f32 %v1077, 0.0
    %v1081 = vld [vmem:[%s5] sm:$0xff]
    %1083 = vset.pattern.permute.xlu0 0
    %1084 = vperm.xlu0 %1083, %v1081
    %v1085 = vpop.permute.xlu0 %1084
    %v1087 = vld [vmem:[%s6] sm:$0xff]
    %1089 = vset.pattern.permute.xlu0 0
    %1090 = vperm.xlu0 %1089, %v1087
    %v1091 = vpop.permute.xlu0 %1090
    %1094 = vset.pattern.permute.xlu0 0
    %1095 = vperm.xlu0 %1094, %v68
    %v1096 = vpop.permute.xlu0 %1095
    %1099 = vset.pattern.permute.xlu0 0
    %1100 = vperm.xlu0 %1099, %v69
    %v1101 = vpop.permute.xlu0 %1100
    %1104 = vset.pattern.permute.xlu0 0
    %1105 = vperm.xlu0 %1104, %v70
    %v1106 = vpop.permute.xlu0 %1105
    %1109 = vset.pattern.permute.xlu0 0
    %1110 = vperm.xlu0 %1109, %v71
    %v1111 = vpop.permute.xlu0 %1110
    %v1114 = vsel %vm90, %v64, 0
    %v1117 = vsel %vm90, %v65, 0
    %v1120 = vsel %vm90, %v66, 0
    %v1123 = vsel %vm90, %v67, 0
    %1125 = vmatprep.subr.mxu0 0.0
    %1126 = vmatpush1.msra.mxu0 0.0
    %1127 = vmatprep.subr.mxu0 0.0
    %1128 = vmatpush1.msra.mxu0 0.0
    %1129 = vmatprep.subr.mxu0 0.0
    %1130 = vmatpush1.msra.mxu0 0.0
    %1131 = vmatprep.subr.mxu0 0.0
    %1132 = vmatpush1.msra.mxu0 0.0
    %1133 = vmatprep.subr.mxu0 0.0
    %1134 = vmatpush1.msra.mxu0 0.0
    %1135 = vmatprep.subr.mxu0 0.0
    %1136 = vmatpush1.msra.mxu0 0.0
    %1137 = vmatprep.subr.mxu0 0.0
    %1138 = vmatpush1.msra.mxu0 0.0
    %1139 = vmatprep.subr.mxu0 0.0
    %1140 = vmatpush1.msra.mxu0 0.0
    %1141 = vmatprep.subr.mxu0 0.0
    %1142 = vmatpush1.msra.mxu0 0.0
    %1143 = vmatprep.subr.mxu0 0.0
    %1144 = vmatpush1.msra.mxu0 0.0
    %1145 = vmatprep.subr.mxu0 0.0
    %1146 = vmatpush1.msra.mxu0 0.0
    %1147 = vmatprep.subr.mxu0 0.0
    %1148 = vmatpush1.msra.mxu0 0.0
    %1149 = vmatprep.subr.mxu0 0.0
    %1150 = vmatpush1.msra.mxu0 0.0
    %1151 = vmatprep.subr.mxu0 0.0
    %1152 = vmatpush1.msra.mxu0 0.0
    %1153 = vmatprep.subr.mxu0 0.0
    %1154 = vmatpush1.msra.mxu0 %v1085
    %1155 = vmatprep.subr.mxu0 0.0
    %1156 = vmatpush1.msra.mxu0 %v464
    %1157 = vmatprep.subr.mxu0 0.0
    %1158 = vmatpush2.msra.mxu0 0.0
    %1159 = vmatprep.subr.mxu0 0.0
    %1160 = vmatpush2.msra.mxu0 0.0
    %1161 = vmatprep.subr.mxu0 0.0
    %1162 = vmatpush2.msra.mxu0 0.0
    %1163 = vmatprep.subr.mxu0 0.0
    %1164 = vmatpush2.msra.mxu0 0.0
    %1165 = vmatprep.subr.mxu0 0.0
    %1166 = vmatpush2.msra.mxu0 0.0
    %1167 = vmatprep.subr.mxu0 0.0
    %1168 = vmatpush2.msra.mxu0 0.0
    %1169 = vmatprep.subr.mxu0 0.0
    %1170 = vmatpush2.msra.mxu0 0.0
    %1171 = vmatprep.subr.mxu0 0.0
    %1172 = vmatpush2.msra.mxu0 0.0
    %1173 = vmatprep.subr.mxu0 0.0
    %1174 = vmatpush2.msra.mxu0 0.0
    %1175 = vmatprep.subr.mxu0 0.0
    %1176 = vmatpush2.msra.mxu0 0.0
    %1177 = vmatprep.subr.mxu0 0.0
    %1178 = vmatpush2.msra.mxu0 0.0
    %1179 = vmatprep.subr.mxu0 0.0
    %1180 = vmatpush2.msra.mxu0 0.0
    %1181 = vmatprep.subr.mxu0 0.0
    %1182 = vmatpush2.msra.mxu0 0.0
    %1183 = vmatprep.subr.mxu0 0.0
    %1184 = vmatpush2.msra.mxu0 0.0
    %1185 = vmatprep.subr.mxu0 0.0
    %1186 = vmatpush2.msra.mxu0 0.0
    %1187 = vmatprep.subr.mxu0 0.0
    %1188 = vmatpush2.msra.mxu0 0.0
    %1189 = vmatprep.mubr.f32.mxu0 0.0
    %1190 = vmatmul.mubr.f32.gmra.mxu0 %v1114
    %v1191 = vpop.f32.mrf.mxu0
    %v1192 = vadd.f32 %v1096, %v1191
    %v1193 = vpop.f32.mrf.mxu0
    %1194 = vmatprep.mubr.f32.mxu0 0.0
    %1195 = vmatmul.mubr.f32.gmra.mxu0 %v1117
    %v1196 = vpop.f32.mrf.mxu0
    %v1197 = vadd.f32 %v1101, %v1196
    %v1198 = vpop.f32.mrf.mxu0
    %1199 = vmatprep.mubr.f32.mxu0 0.0
    %1200 = vmatmul.mubr.f32.gmra.mxu0 %v1120
    %v1201 = vpop.f32.mrf.mxu0
    %v1202 = vadd.f32 %v1106, %v1201
    %v1203 = vpop.f32.mrf.mxu0
    %1204 = vmatprep.mubr.f32.mxu0 0.0
    %1205 = vmatmul.mubr.f32.gmra.mxu0 %v1123
    %v1206 = vpop.f32.mrf.mxu0
    %v1207 = vadd.f32 %v1111, %v1206
    %v1208 = vpop.f32.mrf.mxu0
    %1209 = vdwg.mxu0
    %v1210 = vmul.f32 %v1192, 0.5
    %v1211 = vmul.f32 %v1197, 0.5
    %v1212 = vmul.f32 %v1202, 0.5
    %v1213 = vmul.f32 %v1207, 0.5
    %v1214 = vtanh.pop %v1210
    %v1215 = vtanh.pop %v1211
    %v1216 = vtanh.pop %v1212
    %v1217 = vtanh.pop %v1213
    %v1218 = vmul.f32 %v1214, 0.5
    %v1219 = vmul.f32 %v1215, 0.5
    %v1220 = vmul.f32 %v1216, 0.5
    %v1221 = vmul.f32 %v1217, 0.5
    %v1222 = vadd.f32 %v1218, 0.5
    %v1223 = vadd.f32 %v1219, 0.5
    %v1224 = vadd.f32 %v1220, 0.5
    %v1225 = vadd.f32 %v1221, 0.5
    %v1226 = vmul.f32 %v1223, %v1225
    %v1227 = vmul.f32 %v1222, %v1091
    %v1228 = vadd.f32 %v1226, %v1227
    %v1229 = vtanh.pop %v1228
    %v1230 = vmul.f32 %v1224, %v1229
    %1232 = vset.pattern.permute.xlu0 0
    %1233 = vperm.xlu0 %1232, %v72
    %v1234 = vpop.permute.xlu0 %1233
    %v1236 = vmul.f32 %v1230, %v1234
    %v1237 = vrot.slane %v1236, 4
    %v1238 = vadd.f32 %v1236, %v1237
    %v1239 = vrot.slane %v1238, 2
    %v1240 = vadd.f32 %v1238, %v1239
    %v1241 = vrot.slane %v1240, 1
    %v1242 = vadd.f32 %v1240, %v1241
    %1244 = vset.pattern.permute.xlu0 0
    %1245 = vperm.xlu0 %1244, %v73
    %v1246 = vpop.permute.xlu0 %1245
    %v1248 = vlaneseq
    %v1249 = vshrl.u32 %v1248, 7
    %v1250 = vsub.s32 0, %v1249
    %v1251 = vrot.slane %v1246, %v1250
    %v1252 = vadd.f32 %v1242, %v1251
    %1253 = vmatprep.subr.mxu0 0.0
    %1254 = vmatpush1.msra.mxu0 0.0
    %1255 = vmatprep.subr.mxu0 0.0
    %1256 = vmatpush1.msra.mxu0 0.0
    %1257 = vmatprep.subr.mxu0 0.0
    %1258 = vmatpush1.msra.mxu0 0.0
    %1259 = vmatprep.subr.mxu0 0.0
    %1260 = vmatpush1.msra.mxu0 0.0
    %1261 = vmatprep.subr.mxu0 0.0
    %1262 = vmatpush1.msra.mxu0 0.0
    %1263 = vmatprep.subr.mxu0 0.0
    %1264 = vmatpush1.msra.mxu0 0.0
    %1265 = vmatprep.subr.mxu0 0.0
    %1266 = vmatpush1.msra.mxu0 0.0
    %1267 = vmatprep.subr.mxu0 0.0
    %1268 = vmatpush1.msra.mxu0 0.0
    %1269 = vmatprep.subr.mxu0 0.0
    %1270 = vmatpush1.msra.mxu0 0.0
    %1271 = vmatprep.subr.mxu0 0.0
    %1272 = vmatpush1.msra.mxu0 0.0
    %1273 = vmatprep.subr.mxu0 0.0
    %1274 = vmatpush1.msra.mxu0 0.0
    %1275 = vmatprep.subr.mxu0 0.0
    %1276 = vmatpush1.msra.mxu0 0.0
    %1277 = vmatprep.subr.mxu0 0.0
    %1278 = vmatpush1.msra.mxu0 0.0
    %1279 = vmatprep.subr.mxu0 0.0
    %1280 = vmatpush1.msra.mxu0 0.0
    %1281 = vmatprep.subr.mxu0 0.0
    %1282 = vmatpush1.msra.mxu0 %v1230
    %1283 = vmatprep.subr.mxu0 0.0
    %1284 = vmatpush1.msra.mxu0 %v552
    %1285 = vmatprep.subr.mxu0 0.0
    %1286 = vmatpush2.msra.mxu0 0.0
    %1287 = vmatprep.subr.mxu0 0.0
    %1288 = vmatpush2.msra.mxu0 0.0
    %1289 = vmatprep.subr.mxu0 0.0
    %1290 = vmatpush2.msra.mxu0 0.0
    %1291 = vmatprep.subr.mxu0 0.0
    %1292 = vmatpush2.msra.mxu0 0.0
    %1293 = vmatprep.subr.mxu0 0.0
    %1294 = vmatpush2.msra.mxu0 0.0
    %1295 = vmatprep.subr.mxu0 0.0
    %1296 = vmatpush2.msra.mxu0 0.0
    %1297 = vmatprep.subr.mxu0 0.0
    %1298 = vmatpush2.msra.mxu0 0.0
    %1299 = vmatprep.subr.mxu0 0.0
    %1300 = vmatpush2.msra.mxu0 0.0
    %1301 = vmatprep.subr.mxu0 0.0
    %1302 = vmatpush2.msra.mxu0 0.0
    %1303 = vmatprep.subr.mxu0 0.0
    %1304 = vmatpush2.msra.mxu0 0.0
    %1305 = vmatprep.subr.mxu0 0.0
    %1306 = vmatpush2.msra.mxu0 0.0
    %1307 = vmatprep.subr.mxu0 0.0
    %1308 = vmatpush2.msra.mxu0 0.0
    %1309 = vmatprep.subr.mxu0 0.0
    %1310 = vmatpush2.msra.mxu0 0.0
    %1311 = vmatprep.subr.mxu0 0.0
    %1312 = vmatpush2.msra.mxu0 0.0
    %1313 = vmatprep.subr.mxu0 0.0
    %1314 = vmatpush2.msra.mxu0 0.0
    %1315 = vmatprep.subr.mxu0 0.0
    %1316 = vmatpush2.msra.mxu0 0.0
    %1317 = vmatprep.mubr.f32.mxu0 0.0
    %1318 = vmatmul.mubr.f32.gmra.mxu0 %v1114
    %v1319 = vpop.f32.mrf.mxu0
    %v1320 = vadd.f32 %v1096, %v1319
    %v1321 = vpop.f32.mrf.mxu0
    %1322 = vmatprep.mubr.f32.mxu0 0.0
    %1323 = vmatmul.mubr.f32.gmra.mxu0 %v1117
    %v1324 = vpop.f32.mrf.mxu0
    %v1325 = vadd.f32 %v1101, %v1324
    %v1326 = vpop.f32.mrf.mxu0
    %1327 = vmatprep.mubr.f32.mxu0 0.0
    %1328 = vmatmul.mubr.f32.gmra.mxu0 %v1120
    %v1329 = vpop.f32.mrf.mxu0
    %v1330 = vadd.f32 %v1106, %v1329
    %v1331 = vpop.f32.mrf.mxu0
    %1332 = vmatprep.mubr.f32.mxu0 0.0
    %1333 = vmatmul.mubr.f32.gmra.mxu0 %v1123
    %v1334 = vpop.f32.mrf.mxu0
    %v1335 = vadd.f32 %v1111, %v1334
    %v1336 = vpop.f32.mrf.mxu0
    %1337 = vdwg.mxu0
    %v1338 = vmul.f32 %v1320, 0.5
    %v1339 = vmul.f32 %v1325, 0.5
    %v1340 = vmul.f32 %v1330, 0.5
    %v1341 = vmul.f32 %v1335, 0.5
    %v1342 = vtanh.pop %v1338
    %v1343 = vtanh.pop %v1339
    %v1344 = vtanh.pop %v1340
    %v1345 = vtanh.pop %v1341
    %v1346 = vmul.f32 %v1342, 0.5
    %v1347 = vmul.f32 %v1343, 0.5
    %v1348 = vmul.f32 %v1344, 0.5
    %v1349 = vmul.f32 %v1345, 0.5
    %v1350 = vadd.f32 %v1346, 0.5
    %v1351 = vadd.f32 %v1347, 0.5
    %v1352 = vadd.f32 %v1348, 0.5
    %v1353 = vadd.f32 %v1349, 0.5
    %v1354 = vmul.f32 %v1351, %v1353
    %v1355 = vmul.f32 %v1350, %v1228
    %v1356 = vadd.f32 %v1354, %v1355
    %v1357 = vtanh.pop %v1356
    %v1358 = vmul.f32 %v1352, %v1357
    %v1359 = vmul.f32 %v1358, %v1234
    %v1360 = vrot.slane %v1359, 4
    %v1361 = vadd.f32 %v1359, %v1360
    %v1362 = vrot.slane %v1361, 2
    %v1363 = vadd.f32 %v1361, %v1362
    %v1364 = vrot.slane %v1363, 1
    %v1365 = vadd.f32 %v1363, %v1364
    %v1366 = vadd.f32 %v1365, %v1251
    %1367 = vmatprep.subr.mxu0 0.0
    %1368 = vmatpush1.msra.mxu0 0.0
    %1369 = vmatprep.subr.mxu0 0.0
    %1370 = vmatpush1.msra.mxu0 0.0
    %1371 = vmatprep.subr.mxu0 0.0
    %1372 = vmatpush1.msra.mxu0 0.0
    %1373 = vmatprep.subr.mxu0 0.0
    %1374 = vmatpush1.msra.mxu0 0.0
    %1375 = vmatprep.subr.mxu0 0.0
    %1376 = vmatpush1.msra.mxu0 0.0
    %1377 = vmatprep.subr.mxu0 0.0
    %1378 = vmatpush1.msra.mxu0 0.0
    %1379 = vmatprep.subr.mxu0 0.0
    %1380 = vmatpush1.msra.mxu0 0.0
    %1381 = vmatprep.subr.mxu0 0.0
    %1382 = vmatpush1.msra.mxu0 0.0
    %1383 = vmatprep.subr.mxu0 0.0
    %1384 = vmatpush1.msra.mxu0 0.0
    %1385 = vmatprep.subr.mxu0 0.0
    %1386 = vmatpush1.msra.mxu0 0.0
    %1387 = vmatprep.subr.mxu0 0.0
    %1388 = vmatpush1.msra.mxu0 0.0
    %1389 = vmatprep.subr.mxu0 0.0
    %1390 = vmatpush1.msra.mxu0 0.0
    %1391 = vmatprep.subr.mxu0 0.0
    %1392 = vmatpush1.msra.mxu0 0.0
    %1393 = vmatprep.subr.mxu0 0.0
    %1394 = vmatpush1.msra.mxu0 0.0
    %1395 = vmatprep.subr.mxu0 0.0
    %1396 = vmatpush1.msra.mxu0 %v1358
    %1397 = vmatprep.subr.mxu0 0.0
    %1398 = vmatpush1.msra.mxu0 %v640
    %1399 = vmatprep.subr.mxu0 0.0
    %1400 = vmatpush2.msra.mxu0 0.0
    %1401 = vmatprep.subr.mxu0 0.0
    %1402 = vmatpush2.msra.mxu0 0.0
    %1403 = vmatprep.subr.mxu0 0.0
    %1404 = vmatpush2.msra.mxu0 0.0
    %1405 = vmatprep.subr.mxu0 0.0
    %1406 = vmatpush2.msra.mxu0 0.0
    %1407 = vmatprep.subr.mxu0 0.0
    %1408 = vmatpush2.msra.mxu0 0.0
    %1409 = vmatprep.subr.mxu0 0.0
    %1410 = vmatpush2.msra.mxu0 0.0
    %1411 = vmatprep.subr.mxu0 0.0
    %1412 = vmatpush2.msra.mxu0 0.0
    %1413 = vmatprep.subr.mxu0 0.0
    %1414 = vmatpush2.msra.mxu0 0.0
    %1415 = vmatprep.subr.mxu0 0.0
    %1416 = vmatpush2.msra.mxu0 0.0
    %1417 = vmatprep.subr.mxu0 0.0
    %1418 = vmatpush2.msra.mxu0 0.0
    %1419 = vmatprep.subr.mxu0 0.0
    %1420 = vmatpush2.msra.mxu0 0.0
    %1421 = vmatprep.subr.mxu0 0.0
    %1422 = vmatpush2.msra.mxu0 0.0
    %1423 = vmatprep.subr.mxu0 0.0
    %1424 = vmatpush2.msra.mxu0 0.0
    %1425 = vmatprep.subr.mxu0 0.0
    %1426 = vmatpush2.msra.mxu0 0.0
    %1427 = vmatprep.subr.mxu0 0.0
    %1428 = vmatpush2.msra.mxu0 0.0
    %1429 = vmatprep.subr.mxu0 0.0
    %1430 = vmatpush2.msra.mxu0 0.0
    %1431 = vmatprep.mubr.f32.mxu0 0.0
    %1432 = vmatmul.mubr.f32.gmra.mxu0 %v1114
    %v1433 = vpop.f32.mrf.mxu0
    %v1434 = vadd.f32 %v1096, %v1433
    %v1435 = vpop.f32.mrf.mxu0
    %1436 = vmatprep.mubr.f32.mxu0 0.0
    %1437 = vmatmul.mubr.f32.gmra.mxu0 %v1117
    %v1438 = vpop.f32.mrf.mxu0
    %v1439 = vadd.f32 %v1101, %v1438
    %v1440 = vpop.f32.mrf.mxu0
    %1441 = vmatprep.mubr.f32.mxu0 0.0
    %1442 = vmatmul.mubr.f32.gmra.mxu0 %v1120
    %v1443 = vpop.f32.mrf.mxu0
    %v1444 = vadd.f32 %v1106, %v1443
    %v1445 = vpop.f32.mrf.mxu0
    %1446 = vmatprep.mubr.f32.mxu0 0.0
    %1447 = vmatmul.mubr.f32.gmra.mxu0 %v1123
    %v1448 = vpop.f32.mrf.mxu0
    %v1449 = vadd.f32 %v1111, %v1448
    %v1450 = vpop.f32.mrf.mxu0
    %1451 = vdwg.mxu0
    %v1452 = vmul.f32 %v1434, 0.5
    %v1453 = vmul.f32 %v1439, 0.5
    %v1454 = vmul.f32 %v1444, 0.5
    %v1455 = vmul.f32 %v1449, 0.5
    %v1456 = vtanh.pop %v1452
    %v1457 = vtanh.pop %v1453
    %v1458 = vtanh.pop %v1454
    %v1459 = vtanh.pop %v1455
    %v1460 = vmul.f32 %v1456, 0.5
    %v1461 = vmul.f32 %v1457, 0.5
    %v1462 = vmul.f32 %v1458, 0.5
    %v1463 = vmul.f32 %v1459, 0.5
    %v1464 = vadd.f32 %v1460, 0.5
    %v1465 = vadd.f32 %v1461, 0.5
    %v1466 = vadd.f32 %v1462, 0.5
    %v1467 = vadd.f32 %v1463, 0.5
    %v1468 = vmul.f32 %v1465, %v1467
    %v1469 = vmul.f32 %v1464, %v1356
    %v1470 = vadd.f32 %v1468, %v1469
    %v1471 = vtanh.pop %v1470
    %v1472 = vmul.f32 %v1466, %v1471
    %v1473 = vmul.f32 %v1472, %v1234
    %v1474 = vrot.slane %v1473, 4
    %v1475 = vadd.f32 %v1473, %v1474
    %v1476 = vrot.slane %v1475, 2
    %v1477 = vadd.f32 %v1475, %v1476
    %v1478 = vrot.slane %v1477, 1
    %v1479 = vadd.f32 %v1477, %v1478
    %v1480 = vadd.f32 %v1479, %v1251
    %1481 = vmatprep.subr.mxu0 0.0
    %1482 = vmatpush1.msra.mxu0 0.0
    %1483 = vmatprep.subr.mxu0 0.0
    %1484 = vmatpush1.msra.mxu0 0.0
    %1485 = vmatprep.subr.mxu0 0.0
    %1486 = vmatpush1.msra.mxu0 0.0
    %1487 = vmatprep.subr.mxu0 0.0
    %1488 = vmatpush1.msra.mxu0 0.0
    %1489 = vmatprep.subr.mxu0 0.0
    %1490 = vmatpush1.msra.mxu0 0.0
    %1491 = vmatprep.subr.mxu0 0.0
    %1492 = vmatpush1.msra.mxu0 0.0
    %1493 = vmatprep.subr.mxu0 0.0
    %1494 = vmatpush1.msra.mxu0 0.0
    %1495 = vmatprep.subr.mxu0 0.0
    %1496 = vmatpush1.msra.mxu0 0.0
    %1497 = vmatprep.subr.mxu0 0.0
    %1498 = vmatpush1.msra.mxu0 0.0
    %1499 = vmatprep.subr.mxu0 0.0
    %1500 = vmatpush1.msra.mxu0 0.0
    %1501 = vmatprep.subr.mxu0 0.0
    %1502 = vmatpush1.msra.mxu0 0.0
    %1503 = vmatprep.subr.mxu0 0.0
    %1504 = vmatpush1.msra.mxu0 0.0
    %1505 = vmatprep.subr.mxu0 0.0
    %1506 = vmatpush1.msra.mxu0 0.0
    %1507 = vmatprep.subr.mxu0 0.0
    %1508 = vmatpush1.msra.mxu0 0.0
    %1509 = vmatprep.subr.mxu0 0.0
    %1510 = vmatpush1.msra.mxu0 %v1472
    %1511 = vmatprep.subr.mxu0 0.0
    %1512 = vmatpush1.msra.mxu0 %v728
    %1513 = vmatprep.subr.mxu0 0.0
    %1514 = vmatpush2.msra.mxu0 0.0
    %1515 = vmatprep.subr.mxu0 0.0
    %1516 = vmatpush2.msra.mxu0 0.0
    %1517 = vmatprep.subr.mxu0 0.0
    %1518 = vmatpush2.msra.mxu0 0.0
    %1519 = vmatprep.subr.mxu0 0.0
    %1520 = vmatpush2.msra.mxu0 0.0
    %1521 = vmatprep.subr.mxu0 0.0
    %1522 = vmatpush2.msra.mxu0 0.0
    %1523 = vmatprep.subr.mxu0 0.0
    %1524 = vmatpush2.msra.mxu0 0.0
    %1525 = vmatprep.subr.mxu0 0.0
    %1526 = vmatpush2.msra.mxu0 0.0
    %1527 = vmatprep.subr.mxu0 0.0
    %1528 = vmatpush2.msra.mxu0 0.0
    %1529 = vmatprep.subr.mxu0 0.0
    %1530 = vmatpush2.msra.mxu0 0.0
    %1531 = vmatprep.subr.mxu0 0.0
    %1532 = vmatpush2.msra.mxu0 0.0
    %1533 = vmatprep.subr.mxu0 0.0
    %1534 = vmatpush2.msra.mxu0 0.0
    %1535 = vmatprep.subr.mxu0 0.0
    %1536 = vmatpush2.msra.mxu0 0.0
    %1537 = vmatprep.subr.mxu0 0.0
    %1538 = vmatpush2.msra.mxu0 0.0
    %1539 = vmatprep.subr.mxu0 0.0
    %1540 = vmatpush2.msra.mxu0 0.0
    %1541 = vmatprep.subr.mxu0 0.0
    %1542 = vmatpush2.msra.mxu0 0.0
    %1543 = vmatprep.subr.mxu0 0.0
    %1544 = vmatpush2.msra.mxu0 0.0
    %1545 = vmatprep.mubr.f32.mxu0 0.0
    %1546 = vmatmul.mubr.f32.gmra.mxu0 %v1114
    %v1547 = vpop.f32.mrf.mxu0
    %v1548 = vadd.f32 %v1096, %v1547
    %v1549 = vpop.f32.mrf.mxu0
    %1550 = vmatprep.mubr.f32.mxu0 0.0
    %1551 = vmatmul.mubr.f32.gmra.mxu0 %v1117
    %v1552 = vpop.f32.mrf.mxu0
    %v1553 = vadd.f32 %v1101, %v1552
    %v1554 = vpop.f32.mrf.mxu0
    %1555 = vmatprep.mubr.f32.mxu0 0.0
    %1556 = vmatmul.mubr.f32.gmra.mxu0 %v1120
    %v1557 = vpop.f32.mrf.mxu0
    %v1558 = vadd.f32 %v1106, %v1557
    %v1559 = vpop.f32.mrf.mxu0
    %1560 = vmatprep.mubr.f32.mxu0 0.0
    %1561 = vmatmul.mubr.f32.gmra.mxu0 %v1123
    %v1562 = vpop.f32.mrf.mxu0
    %v1563 = vadd.f32 %v1111, %v1562
    %v1564 = vpop.f32.mrf.mxu0
    %1565 = vdwg.mxu0
    %v1566 = vmul.f32 %v1548, 0.5
    %v1567 = vmul.f32 %v1553, 0.5
    %v1568 = vmul.f32 %v1558, 0.5
    %v1569 = vmul.f32 %v1563, 0.5
    %v1570 = vtanh.pop %v1566
    %v1571 = vtanh.pop %v1567
    %v1572 = vtanh.pop %v1568
    %v1573 = vtanh.pop %v1569
    %v1574 = vmul.f32 %v1570, 0.5
    %v1575 = vmul.f32 %v1571, 0.5
    %v1576 = vmul.f32 %v1572, 0.5
    %v1577 = vmul.f32 %v1573, 0.5
    %v1578 = vadd.f32 %v1574, 0.5
    %v1579 = vadd.f32 %v1575, 0.5
    %v1580 = vadd.f32 %v1576, 0.5
    %v1581 = vadd.f32 %v1577, 0.5
    %v1582 = vmul.f32 %v1579, %v1581
    %v1583 = vmul.f32 %v1578, %v1470
    %v1584 = vadd.f32 %v1582, %v1583
    %v1585 = vtanh.pop %v1584
    %v1586 = vmul.f32 %v1580, %v1585
    %v1587 = vmul.f32 %v1586, %v1234
    %v1588 = vrot.slane %v1587, 4
    %v1589 = vadd.f32 %v1587, %v1588
    %v1590 = vrot.slane %v1589, 2
    %v1591 = vadd.f32 %v1589, %v1590
    %v1592 = vrot.slane %v1591, 1
    %v1593 = vadd.f32 %v1591, %v1592
    %v1594 = vadd.f32 %v1593, %v1251
    %1595 = vmatprep.subr.mxu0 0.0
    %1596 = vmatpush1.msra.mxu0 0.0
    %1597 = vmatprep.subr.mxu0 0.0
    %1598 = vmatpush1.msra.mxu0 0.0
    %1599 = vmatprep.subr.mxu0 0.0
    %1600 = vmatpush1.msra.mxu0 0.0
    %1601 = vmatprep.subr.mxu0 0.0
    %1602 = vmatpush1.msra.mxu0 0.0
    %1603 = vmatprep.subr.mxu0 0.0
    %1604 = vmatpush1.msra.mxu0 0.0
    %1605 = vmatprep.subr.mxu0 0.0
    %1606 = vmatpush1.msra.mxu0 0.0
    %1607 = vmatprep.subr.mxu0 0.0
    %1608 = vmatpush1.msra.mxu0 0.0
    %1609 = vmatprep.subr.mxu0 0.0
    %1610 = vmatpush1.msra.mxu0 0.0
    %1611 = vmatprep.subr.mxu0 0.0
    %1612 = vmatpush1.msra.mxu0 0.0
    %1613 = vmatprep.subr.mxu0 0.0
    %1614 = vmatpush1.msra.mxu0 0.0
    %1615 = vmatprep.subr.mxu0 0.0
    %1616 = vmatpush1.msra.mxu0 0.0
    %1617 = vmatprep.subr.mxu0 0.0
    %1618 = vmatpush1.msra.mxu0 0.0
    %1619 = vmatprep.subr.mxu0 0.0
    %1620 = vmatpush1.msra.mxu0 0.0
    %1621 = vmatprep.subr.mxu0 0.0
    %1622 = vmatpush1.msra.mxu0 0.0
    %1623 = vmatprep.subr.mxu0 0.0
    %1624 = vmatpush1.msra.mxu0 %v1586
    %1625 = vmatprep.subr.mxu0 0.0
    %1626 = vmatpush1.msra.mxu0 %v816
    %1627 = vmatprep.subr.mxu0 0.0
    %1628 = vmatpush2.msra.mxu0 0.0
    %1629 = vmatprep.subr.mxu0 0.0
    %1630 = vmatpush2.msra.mxu0 0.0
    %1631 = vmatprep.subr.mxu0 0.0
    %1632 = vmatpush2.msra.mxu0 0.0
    %1633 = vmatprep.subr.mxu0 0.0
    %1634 = vmatpush2.msra.mxu0 0.0
    %1635 = vmatprep.subr.mxu0 0.0
    %1636 = vmatpush2.msra.mxu0 0.0
    %1637 = vmatprep.subr.mxu0 0.0
    %1638 = vmatpush2.msra.mxu0 0.0
    %1639 = vmatprep.subr.mxu0 0.0
    %1640 = vmatpush2.msra.mxu0 0.0
    %1641 = vmatprep.subr.mxu0 0.0
    %1642 = vmatpush2.msra.mxu0 0.0
    %1643 = vmatprep.subr.mxu0 0.0
    %1644 = vmatpush2.msra.mxu0 0.0
    %1645 = vmatprep.subr.mxu0 0.0
    %1646 = vmatpush2.msra.mxu0 0.0
    %1647 = vmatprep.subr.mxu0 0.0
    %1648 = vmatpush2.msra.mxu0 0.0
    %1649 = vmatprep.subr.mxu0 0.0
    %1650 = vmatpush2.msra.mxu0 0.0
    %1651 = vmatprep.subr.mxu0 0.0
    %1652 = vmatpush2.msra.mxu0 0.0
    %1653 = vmatprep.subr.mxu0 0.0
    %1654 = vmatpush2.msra.mxu0 0.0
    %1655 = vmatprep.subr.mxu0 0.0
    %1656 = vmatpush2.msra.mxu0 0.0
    %1657 = vmatprep.subr.mxu0 0.0
    %1658 = vmatpush2.msra.mxu0 0.0
    %1659 = vmatprep.mubr.f32.mxu0 0.0
    %1660 = vmatmul.mubr.f32.gmra.mxu0 %v1114
    %v1661 = vpop.f32.mrf.mxu0
    %v1662 = vadd.f32 %v1096, %v1661
    %v1663 = vpop.f32.mrf.mxu0
    %1664 = vmatprep.mubr.f32.mxu0 0.0
    %1665 = vmatmul.mubr.f32.gmra.mxu0 %v1117
    %v1666 = vpop.f32.mrf.mxu0
    %v1667 = vadd.f32 %v1101, %v1666
    %v1668 = vpop.f32.mrf.mxu0
    %1669 = vmatprep.mubr.f32.mxu0 0.0
    %1670 = vmatmul.mubr.f32.gmra.mxu0 %v1120
    %v1671 = vpop.f32.mrf.mxu0
    %v1672 = vadd.f32 %v1106, %v1671
    %v1673 = vpop.f32.mrf.mxu0
    %1674 = vmatprep.mubr.f32.mxu0 0.0
    %1675 = vmatmul.mubr.f32.gmra.mxu0 %v1123
    %v1676 = vpop.f32.mrf.mxu0
    %v1677 = vadd.f32 %v1111, %v1676
    %v1678 = vpop.f32.mrf.mxu0
    %1679 = vdwg.mxu0
    %v1680 = vmul.f32 %v1662, 0.5
    %v1681 = vmul.f32 %v1667, 0.5
    %v1682 = vmul.f32 %v1672, 0.5
    %v1683 = vmul.f32 %v1677, 0.5
    %v1684 = vtanh.pop %v1680
    %v1685 = vtanh.pop %v1681
    %v1686 = vtanh.pop %v1682
    %v1687 = vtanh.pop %v1683
    %v1688 = vmul.f32 %v1684, 0.5
    %v1689 = vmul.f32 %v1685, 0.5
    %v1690 = vmul.f32 %v1686, 0.5
    %v1691 = vmul.f32 %v1687, 0.5
    %v1692 = vadd.f32 %v1688, 0.5
    %v1693 = vadd.f32 %v1689, 0.5
    %v1694 = vadd.f32 %v1690, 0.5
    %v1695 = vadd.f32 %v1691, 0.5
    %v1696 = vmul.f32 %v1693, %v1695
    %v1697 = vmul.f32 %v1692, %v1584
    %v1698 = vadd.f32 %v1696, %v1697
    %v1699 = vtanh.pop %v1698
    %v1700 = vmul.f32 %v1694, %v1699
    %v1701 = vmul.f32 %v1700, %v1234
    %v1702 = vrot.slane %v1701, 4
    %v1703 = vadd.f32 %v1701, %v1702
    %v1704 = vrot.slane %v1703, 2
    %v1705 = vadd.f32 %v1703, %v1704
    %v1706 = vrot.slane %v1705, 1
    %v1707 = vadd.f32 %v1705, %v1706
    %v1708 = vadd.f32 %v1707, %v1251
    %1709 = vmatprep.subr.mxu0 0.0
    %1710 = vmatpush1.msra.mxu0 0.0
    %1711 = vmatprep.subr.mxu0 0.0
    %1712 = vmatpush1.msra.mxu0 0.0
    %1713 = vmatprep.subr.mxu0 0.0
    %1714 = vmatpush1.msra.mxu0 0.0
    %1715 = vmatprep.subr.mxu0 0.0
    %1716 = vmatpush1.msra.mxu0 0.0
    %1717 = vmatprep.subr.mxu0 0.0
    %1718 = vmatpush1.msra.mxu0 0.0
    %1719 = vmatprep.subr.mxu0 0.0
    %1720 = vmatpush1.msra.mxu0 0.0
    %1721 = vmatprep.subr.mxu0 0.0
    %1722 = vmatpush1.msra.mxu0 0.0
    %1723 = vmatprep.subr.mxu0 0.0
    %1724 = vmatpush1.msra.mxu0 0.0
    %1725 = vmatprep.subr.mxu0 0.0
    %1726 = vmatpush1.msra.mxu0 0.0
    %1727 = vmatprep.subr.mxu0 0.0
    %1728 = vmatpush1.msra.mxu0 0.0
    %1729 = vmatprep.subr.mxu0 0.0
    %1730 = vmatpush1.msra.mxu0 0.0
    %1731 = vmatprep.subr.mxu0 0.0
    %1732 = vmatpush1.msra.mxu0 0.0
    %1733 = vmatprep.subr.mxu0 0.0
    %1734 = vmatpush1.msra.mxu0 0.0
    %1735 = vmatprep.subr.mxu0 0.0
    %1736 = vmatpush1.msra.mxu0 0.0
    %1737 = vmatprep.subr.mxu0 0.0
    %1738 = vmatpush1.msra.mxu0 %v1700
    %1739 = vmatprep.subr.mxu0 0.0
    %1740 = vmatpush1.msra.mxu0 %v904
    %1741 = vmatprep.subr.mxu0 0.0
    %1742 = vmatpush2.msra.mxu0 0.0
    %1743 = vmatprep.subr.mxu0 0.0
    %1744 = vmatpush2.msra.mxu0 0.0
    %1745 = vmatprep.subr.mxu0 0.0
    %1746 = vmatpush2.msra.mxu0 0.0
    %1747 = vmatprep.subr.mxu0 0.0
    %1748 = vmatpush2.msra.mxu0 0.0
    %1749 = vmatprep.subr.mxu0 0.0
    %1750 = vmatpush2.msra.mxu0 0.0
    %1751 = vmatprep.subr.mxu0 0.0
    %1752 = vmatpush2.msra.mxu0 0.0
    %1753 = vmatprep.subr.mxu0 0.0
    %1754 = vmatpush2.msra.mxu0 0.0
    %1755 = vmatprep.subr.mxu0 0.0
    %1756 = vmatpush2.msra.mxu0 0.0
    %1757 = vmatprep.subr.mxu0 0.0
    %1758 = vmatpush2.msra.mxu0 0.0
    %1759 = vmatprep.subr.mxu0 0.0
    %1760 = vmatpush2.msra.mxu0 0.0
    %1761 = vmatprep.subr.mxu0 0.0
    %1762 = vmatpush2.msra.mxu0 0.0
    %1763 = vmatprep.subr.mxu0 0.0
    %1764 = vmatpush2.msra.mxu0 0.0
    %1765 = vmatprep.subr.mxu0 0.0
    %1766 = vmatpush2.msra.mxu0 0.0
    %1767 = vmatprep.subr.mxu0 0.0
    %1768 = vmatpush2.msra.mxu0 0.0
    %1769 = vmatprep.subr.mxu0 0.0
    %1770 = vmatpush2.msra.mxu0 0.0
    %1771 = vmatprep.subr.mxu0 0.0
    %1772 = vmatpush2.msra.mxu0 0.0
    %1773 = vmatprep.mubr.f32.mxu0 0.0
    %1774 = vmatmul.mubr.f32.gmra.mxu0 %v1114
    %v1775 = vpop.f32.mrf.mxu0
    %v1776 = vadd.f32 %v1096, %v1775
    %v1777 = vpop.f32.mrf.mxu0
    %1778 = vmatprep.mubr.f32.mxu0 0.0
    %1779 = vmatmul.mubr.f32.gmra.mxu0 %v1117
    %v1780 = vpop.f32.mrf.mxu0
    %v1781 = vadd.f32 %v1101, %v1780
    %v1782 = vpop.f32.mrf.mxu0
    %1783 = vmatprep.mubr.f32.mxu0 0.0
    %1784 = vmatmul.mubr.f32.gmra.mxu0 %v1120
    %v1785 = vpop.f32.mrf.mxu0
    %v1786 = vadd.f32 %v1106, %v1785
    %v1787 = vpop.f32.mrf.mxu0
    %1788 = vmatprep.mubr.f32.mxu0 0.0
    %1789 = vmatmul.mubr.f32.gmra.mxu0 %v1123
    %v1790 = vpop.f32.mrf.mxu0
    %v1791 = vadd.f32 %v1111, %v1790
    %v1792 = vpop.f32.mrf.mxu0
    %1793 = vdwg.mxu0
    %v1794 = vmul.f32 %v1776, 0.5
    %v1795 = vmul.f32 %v1781, 0.5
    %v1796 = vmul.f32 %v1786, 0.5
    %v1797 = vmul.f32 %v1791, 0.5
    %v1798 = vtanh.pop %v1794
    %v1799 = vtanh.pop %v1795
    %v1800 = vtanh.pop %v1796
    %v1801 = vtanh.pop %v1797
    %v1802 = vmul.f32 %v1798, 0.5
    %v1803 = vmul.f32 %v1799, 0.5
    %v1804 = vmul.f32 %v1800, 0.5
    %v1805 = vmul.f32 %v1801, 0.5
    %v1806 = vadd.f32 %v1802, 0.5
    %v1807 = vadd.f32 %v1803, 0.5
    %v1808 = vadd.f32 %v1804, 0.5
    %v1809 = vadd.f32 %v1805, 0.5
    %v1810 = vmul.f32 %v1807, %v1809
    %v1811 = vmul.f32 %v1806, %v1698
    %v1812 = vadd.f32 %v1810, %v1811
    %v1813 = vtanh.pop %v1812
    %v1814 = vmul.f32 %v1808, %v1813
    %v1815 = vmul.f32 %v1814, %v1234
    %v1816 = vrot.slane %v1815, 4
    %v1817 = vadd.f32 %v1815, %v1816
    %v1818 = vrot.slane %v1817, 2
    %v1819 = vadd.f32 %v1817, %v1818
    %v1820 = vrot.slane %v1819, 1
    %v1821 = vadd.f32 %v1819, %v1820
    %v1822 = vadd.f32 %v1821, %v1251
    %1823 = vmatprep.subr.mxu0 0.0
    %1824 = vmatpush1.msra.mxu0 0.0
    %1825 = vmatprep.subr.mxu0 0.0
    %1826 = vmatpush1.msra.mxu0 0.0
    %1827 = vmatprep.subr.mxu0 0.0
    %1828 = vmatpush1.msra.mxu0 0.0
    %1829 = vmatprep.subr.mxu0 0.0
    %1830 = vmatpush1.msra.mxu0 0.0
    %1831 = vmatprep.subr.mxu0 0.0
    %1832 = vmatpush1.msra.mxu0 0.0
    %1833 = vmatprep.subr.mxu0 0.0
    %1834 = vmatpush1.msra.mxu0 0.0
    %1835 = vmatprep.subr.mxu0 0.0
    %1836 = vmatpush1.msra.mxu0 0.0
    %1837 = vmatprep.subr.mxu0 0.0
    %1838 = vmatpush1.msra.mxu0 0.0
    %1839 = vmatprep.subr.mxu0 0.0
    %1840 = vmatpush1.msra.mxu0 0.0
    %1841 = vmatprep.subr.mxu0 0.0
    %1842 = vmatpush1.msra.mxu0 0.0
    %1843 = vmatprep.subr.mxu0 0.0
    %1844 = vmatpush1.msra.mxu0 0.0
    %1845 = vmatprep.subr.mxu0 0.0
    %1846 = vmatpush1.msra.mxu0 0.0
    %1847 = vmatprep.subr.mxu0 0.0
    %1848 = vmatpush1.msra.mxu0 0.0
    %1849 = vmatprep.subr.mxu0 0.0
    %1850 = vmatpush1.msra.mxu0 0.0
    %1851 = vmatprep.subr.mxu0 0.0
    %1852 = vmatpush1.msra.mxu0 %v1814
    %1853 = vmatprep.subr.mxu0 0.0
    %1854 = vmatpush1.msra.mxu0 %v992
    %1855 = vmatprep.subr.mxu0 0.0
    %1856 = vmatpush2.msra.mxu0 0.0
    %1857 = vmatprep.subr.mxu0 0.0
    %1858 = vmatpush2.msra.mxu0 0.0
    %1859 = vmatprep.subr.mxu0 0.0
    %1860 = vmatpush2.msra.mxu0 0.0
    %1861 = vmatprep.subr.mxu0 0.0
    %1862 = vmatpush2.msra.mxu0 0.0
    %1863 = vmatprep.subr.mxu0 0.0
    %1864 = vmatpush2.msra.mxu0 0.0
    %1865 = vmatprep.subr.mxu0 0.0
    %1866 = vmatpush2.msra.mxu0 0.0
    %1867 = vmatprep.subr.mxu0 0.0
    %1868 = vmatpush2.msra.mxu0 0.0
    %1869 = vmatprep.subr.mxu0 0.0
    %1870 = vmatpush2.msra.mxu0 0.0
    %1871 = vmatprep.subr.mxu0 0.0
    %1872 = vmatpush2.msra.mxu0 0.0
    %1873 = vmatprep.subr.mxu0 0.0
    %1874 = vmatpush2.msra.mxu0 0.0
    %1875 = vmatprep.subr.mxu0 0.0
    %1876 = vmatpush2.msra.mxu0 0.0
    %1877 = vmatprep.subr.mxu0 0.0
    %1878 = vmatpush2.msra.mxu0 0.0
    %1879 = vmatprep.subr.mxu0 0.0
    %1880 = vmatpush2.msra.mxu0 0.0
    %1881 = vmatprep.subr.mxu0 0.0
    %1882 = vmatpush2.msra.mxu0 0.0
    %1883 = vmatprep.subr.mxu0 0.0
    %1884 = vmatpush2.msra.mxu0 0.0
    %1885 = vmatprep.subr.mxu0 0.0
    %1886 = vmatpush2.msra.mxu0 0.0
    %1887 = vmatprep.mubr.f32.mxu0 0.0
    %1888 = vmatmul.mubr.f32.gmra.mxu0 %v1114
    %v1889 = vpop.f32.mrf.mxu0
    %v1890 = vadd.f32 %v1096, %v1889
    %v1891 = vpop.f32.mrf.mxu0
    %1892 = vmatprep.mubr.f32.mxu0 0.0
    %1893 = vmatmul.mubr.f32.gmra.mxu0 %v1117
    %v1894 = vpop.f32.mrf.mxu0
    %v1895 = vadd.f32 %v1101, %v1894
    %v1896 = vpop.f32.mrf.mxu0
    %1897 = vmatprep.mubr.f32.mxu0 0.0
    %1898 = vmatmul.mubr.f32.gmra.mxu0 %v1120
    %v1899 = vpop.f32.mrf.mxu0
    %v1900 = vadd.f32 %v1106, %v1899
    %v1901 = vpop.f32.mrf.mxu0
    %1902 = vmatprep.mubr.f32.mxu0 0.0
    %1903 = vmatmul.mubr.f32.gmra.mxu0 %v1123
    %v1904 = vpop.f32.mrf.mxu0
    %v1905 = vadd.f32 %v1111, %v1904
    %v1906 = vpop.f32.mrf.mxu0
    %1907 = vdwg.mxu0
    %v1908 = vmul.f32 %v1890, 0.5
    %v1909 = vmul.f32 %v1895, 0.5
    %v1910 = vmul.f32 %v1900, 0.5
    %v1911 = vmul.f32 %v1905, 0.5
    %v1912 = vtanh.pop %v1908
    %v1913 = vtanh.pop %v1909
    %v1914 = vtanh.pop %v1910
    %v1915 = vtanh.pop %v1911
    %v1916 = vmul.f32 %v1912, 0.5
    %v1917 = vmul.f32 %v1913, 0.5
    %v1918 = vmul.f32 %v1914, 0.5
    %v1919 = vmul.f32 %v1915, 0.5
    %v1920 = vadd.f32 %v1916, 0.5
    %v1921 = vadd.f32 %v1917, 0.5
    %v1922 = vadd.f32 %v1918, 0.5
    %v1923 = vadd.f32 %v1919, 0.5
    %v1924 = vmul.f32 %v1921, %v1923
    %v1925 = vmul.f32 %v1920, %v1812
    %v1926 = vadd.f32 %v1924, %v1925
    %v1927 = vtanh.pop %v1926
    %v1928 = vmul.f32 %v1922, %v1927
    %v1929 = vmul.f32 %v1928, %v1234
    %v1930 = vrot.slane %v1929, 4
    %v1931 = vadd.f32 %v1929, %v1930
    %v1932 = vrot.slane %v1931, 2
    %v1933 = vadd.f32 %v1931, %v1932
    %v1934 = vrot.slane %v1933, 1
    %v1935 = vadd.f32 %v1933, %v1934
    %v1936 = vadd.f32 %v1935, %v1251
    %1937 = vmatprep.subr.mxu0 0.0
    %1938 = vmatpush1.msra.mxu0 0.0
    %1939 = vmatprep.subr.mxu0 0.0
    %1940 = vmatpush1.msra.mxu0 0.0
    %1941 = vmatprep.subr.mxu0 0.0
    %1942 = vmatpush1.msra.mxu0 0.0
    %1943 = vmatprep.subr.mxu0 0.0
    %1944 = vmatpush1.msra.mxu0 0.0
    %1945 = vmatprep.subr.mxu0 0.0
    %1946 = vmatpush1.msra.mxu0 0.0
    %1947 = vmatprep.subr.mxu0 0.0
    %1948 = vmatpush1.msra.mxu0 0.0
    %1949 = vmatprep.subr.mxu0 0.0
    %1950 = vmatpush1.msra.mxu0 0.0
    %1951 = vmatprep.subr.mxu0 0.0
    %1952 = vmatpush1.msra.mxu0 0.0
    %1953 = vmatprep.subr.mxu0 0.0
    %1954 = vmatpush1.msra.mxu0 0.0
    %1955 = vmatprep.subr.mxu0 0.0
    %1956 = vmatpush1.msra.mxu0 0.0
    %1957 = vmatprep.subr.mxu0 0.0
    %1958 = vmatpush1.msra.mxu0 0.0
    %1959 = vmatprep.subr.mxu0 0.0
    %1960 = vmatpush1.msra.mxu0 0.0
    %1961 = vmatprep.subr.mxu0 0.0
    %1962 = vmatpush1.msra.mxu0 0.0
    %1963 = vmatprep.subr.mxu0 0.0
    %1964 = vmatpush1.msra.mxu0 0.0
    %1965 = vmatprep.subr.mxu0 0.0
    %1966 = vmatpush1.msra.mxu0 %v1928
    %1967 = vmatprep.subr.mxu0 0.0
    %1968 = vmatpush1.msra.mxu0 %v1080
    %1969 = vmatprep.subr.mxu0 0.0
    %1970 = vmatpush2.msra.mxu0 0.0
    %1971 = vmatprep.subr.mxu0 0.0
    %1972 = vmatpush2.msra.mxu0 0.0
    %1973 = vmatprep.subr.mxu0 0.0
    %1974 = vmatpush2.msra.mxu0 0.0
    %1975 = vmatprep.subr.mxu0 0.0
    %1976 = vmatpush2.msra.mxu0 0.0
    %1977 = vmatprep.subr.mxu0 0.0
    %1978 = vmatpush2.msra.mxu0 0.0
    %1979 = vmatprep.subr.mxu0 0.0
    %1980 = vmatpush2.msra.mxu0 0.0
    %1981 = vmatprep.subr.mxu0 0.0
    %1982 = vmatpush2.msra.mxu0 0.0
    %1983 = vmatprep.subr.mxu0 0.0
    %1984 = vmatpush2.msra.mxu0 0.0
    %1985 = vmatprep.subr.mxu0 0.0
    %1986 = vmatpush2.msra.mxu0 0.0
    %1987 = vmatprep.subr.mxu0 0.0
    %1988 = vmatpush2.msra.mxu0 0.0
    %1989 = vmatprep.subr.mxu0 0.0
    %1990 = vmatpush2.msra.mxu0 0.0
    %1991 = vmatprep.subr.mxu0 0.0
    %1992 = vmatpush2.msra.mxu0 0.0
    %1993 = vmatprep.subr.mxu0 0.0
    %1994 = vmatpush2.msra.mxu0 0.0
    %1995 = vmatprep.subr.mxu0 0.0
    %1996 = vmatpush2.msra.mxu0 0.0
    %1997 = vmatprep.subr.mxu0 0.0
    %1998 = vmatpush2.msra.mxu0 0.0
    %1999 = vmatprep.subr.mxu0 0.0
    %2000 = vmatpush2.msra.mxu0 0.0
    %2001 = vmatprep.mubr.f32.mxu0 0.0
    %2002 = vmatmul.mubr.f32.gmra.mxu0 %v1114
    %v2003 = vpop.f32.mrf.mxu0
    %v2004 = vadd.f32 %v1096, %v2003
    %v2005 = vpop.f32.mrf.mxu0
    %2006 = vmatprep.mubr.f32.mxu0 0.0
    %2007 = vmatmul.mubr.f32.gmra.mxu0 %v1117
    %v2008 = vpop.f32.mrf.mxu0
    %v2009 = vadd.f32 %v1101, %v2008
    %v2010 = vpop.f32.mrf.mxu0
    %2011 = vmatprep.mubr.f32.mxu0 0.0
    %2012 = vmatmul.mubr.f32.gmra.mxu0 %v1120
    %v2013 = vpop.f32.mrf.mxu0
    %v2014 = vadd.f32 %v1106, %v2013
    %v2015 = vpop.f32.mrf.mxu0
    %2016 = vmatprep.mubr.f32.mxu0 0.0
    %2017 = vmatmul.mubr.f32.gmra.mxu0 %v1123
    %v2018 = vpop.f32.mrf.mxu0
    %v2019 = vadd.f32 %v1111, %v2018
    %v2020 = vpop.f32.mrf.mxu0
    %2021 = vdwg.mxu0
    %v2022 = vmul.f32 %v2004, 0.5
    %v2023 = vmul.f32 %v2009, 0.5
    %v2024 = vmul.f32 %v2014, 0.5
    %v2025 = vmul.f32 %v2019, 0.5
    %v2026 = vtanh.pop %v2022
    %v2027 = vtanh.pop %v2023
    %v2028 = vtanh.pop %v2024
    %v2029 = vtanh.pop %v2025
    %v2030 = vmul.f32 %v2026, 0.5
    %v2031 = vmul.f32 %v2027, 0.5
    %v2032 = vmul.f32 %v2028, 0.5
    %v2033 = vmul.f32 %v2029, 0.5
    %v2034 = vadd.f32 %v2030, 0.5
    %v2035 = vadd.f32 %v2031, 0.5
    %v2036 = vadd.f32 %v2032, 0.5
    %v2037 = vadd.f32 %v2033, 0.5
    %v2038 = vmul.f32 %v2035, %v2037
    %v2039 = vmul.f32 %v2034, %v1926
    %v2040 = vadd.f32 %v2038, %v2039
    %v2041 = vtanh.pop %v2040
    %v2042 = vmul.f32 %v2036, %v2041
    %v2043 = vmul.f32 %v2042, %v1234
    %v2044 = vrot.slane %v2043, 4
    %v2045 = vadd.f32 %v2043, %v2044
    %v2046 = vrot.slane %v2045, 2
    %v2047 = vadd.f32 %v2045, %v2046
    %v2048 = vrot.slane %v2047, 1
    %v2049 = vadd.f32 %v2047, %v2048
    %v2050 = vadd.f32 %v2049, %v1251
    %vm2051 = vcmask 1040384
    %v2052 = vsel %vm2051, %v1252, %v1366
    %vm2053 = vcmask 1041408
    %v2054 = vsel %vm2053, %v2052, %v1480
    %vm2055 = vcmask 1042432
    %v2056 = vsel %vm2055, %v2054, %v1594
    %vm2057 = vcmask 1043456
    %v2058 = vsel %vm2057, %v2056, %v1708
    %vm2059 = vcmask 1044480
    %v2060 = vsel %vm2059, %v2058, %v1822
    %vm2061 = vcmask 1045504
    %v2062 = vsel %vm2061, %v2060, %v1936
    %vm2063 = vcmask 1046528
    %v2064 = vsel %vm2063, %v2062, %v2050
    %2065 = vst [vmem:[#allocation8] sm:$0xff] %v2064
    // Predicated region
    $region46: #{tpu_custom_call.1} parent=1 // pred_check
      _
    $region47: #{tpu_custom_call.1} parent=1 // pred_check_branch
      %2067 = sbr.rel (0) target = $region49
    $region48: #{tpu_custom_call.1} parent=1 // pred_region
      %s2069 = ssub.s32 128, 128
      %2070 = vsyncadd [#allocation5], %s2069
      %s2072 = sshll.u32 [#allocation8], 4
      %s2073 = int_to_ptr.vmem [resolvable:$true] %s2072
      %2075 = dma.vmem_to_hbm [thread:$0]  %s2073, 128, %s9, [#allocation5]
    $region49: #{tpu_custom_call.1} parent=1 // pred_fallthru
      _
    // Predicated region
    $region50: #{tpu_custom_call.1} parent=1 // pred_check
      _
    $region51: #{tpu_custom_call.1} parent=1 // pred_check_branch
      %2077 = sbr.rel (0) target = $region53
    $region52: #{tpu_custom_call.1} parent=1 // pred_region
      %2078 = dma.done [#allocation5], 128
    $region53: #{tpu_custom_call.1} parent=1 // pred_fallthru
      _
    %2079 = vsyncpa [#allocation4], 1
    %2080 = vsyncpa [#allocation7], 1
    %2081 = vsyncpa [#allocation5], 1

</llo_original>
